<compile_context>
chip_gen: v5e
topology: v5e:2x2
jax: 0.10.0
libtpu: 0.0.40
codegen_flags: <defaults>
</compile_context>

<pallas_src>
import jax
import jax.numpy as jnp
from jax.experimental import pallas as pl
from jax.experimental.pallas import tpu as pltpu


# ----------------------------------------------------------------------------
# Fused voxel-head kernel
# ----------------------------------------------------------------------------
def _build_voxel_head_kernel(num_conv, Bc, S, dot_dtype):
    """Fused: [3x3 conv + ReLU] * num_conv -> 2x2 stride-2 deconv + ReLU
    -> 1x1 predictor (+ sigmoid).  Ref order:
       x, (w_i, b_i)*num_conv, wd, bd, wp, bp, logit_out, prob_out, pad_scratch*num_conv
    """
    M = Bc * S * S  # batch folded into the matmul M dimension

    def kernel(*refs):
        x_ref = refs[0]
        conv_refs = refs[1:1 + 2 * num_conv]
        wd_ref, bd_ref, wp_ref, bp_ref = refs[1 + 2 * num_conv:5 + 2 * num_conv]
        logit_ref, prob_ref = refs[5 + 2 * num_conv:7 + 2 * num_conv]
        pad_refs = refs[7 + 2 * num_conv:]

        cur = x_ref[...].astype(jnp.float32)                 # (Bc, S, S, Cin)

        # ---- 3x3 conv + ReLU stack: im2col -> one (M, 9*Cin) x (9*Cin, C) matmul ----
        for li in range(num_conv):
            w_ref = conv_refs[2 * li]                        # (9*cin, cout)
            b_ref = conv_refs[2 * li + 1]                    # (1, cout)
            pad_ref = pad_refs[li]                           # (Bc, S+2, S+2, cin) VMEM
            cin = pad_ref.shape[-1]
            cout = w_ref.shape[-1]

            # zero-pad H and W inside the kernel (no HBM pad round-trip); stage in VMEM
            zw = jnp.zeros((Bc, S, 1, cin), jnp.float32)
            zh = jnp.zeros((Bc, 1, S + 2, cin), jnp.float32)
            xp = jnp.concatenate([zw, cur, zw], axis=2)      # pad along W
            pad_ref[...] = jnp.concatenate([zh, xp, zh], axis=1)   # pad along H

            # im2col: 9 shifted tap views concatenated along channels -> single matmul
            cols = [pad_ref[:, ky:ky + S, kx:kx + S, :].reshape(M, cin)
                    for ky in range(3) for kx in range(3)]
            patches = jnp.concatenate(cols, axis=-1).astype(dot_dtype)   # (M, 9*cin)
            h = jnp.dot(patches, w_ref[...], preferred_element_type=jnp.float32)
            h = jnp.maximum(h + b_ref[...], 0.0)             # (M, cout), f32
            cur = h.reshape(Bc, S, S, cout)

        # ---- 2x2 stride-2 ConvTranspose + ReLU: each output sub-pixel (di, dj) is an
        # independent 1x1 conv of the same input pixel -> one (M, C) x (C, 4C) matmul.
        C = cur.shape[-1]
        x2 = cur.reshape(M, C).astype(dot_dtype)
        y = jnp.dot(x2, wd_ref[...], preferred_element_type=jnp.float32)
        y = jnp.maximum(y + bd_ref[...], 0.0)                # (M, 4*C); col = (di*2+dj)*C + c

        # ---- 1x1 predictor fused over the 4 sub-pixels via a block-diagonal weight
        # (no re-interleave in the kernel, 64-lane-wide stores instead of 16).
        logits = jnp.dot(y.astype(dot_dtype), wp_ref[...],
                         preferred_element_type=jnp.float32) + bp_ref[...]   # (M, 4*D)
        logit_ref[0] = logits.astype(logit_ref.dtype)
        prob_ref[0] = jax.nn.sigmoid(logits).astype(prob_ref.dtype)  # EUP sigmoid; bf16 store

    return kernel


def _pick_batch_block(batch, spatial, max_rows=512):
    """Largest divisor of `batch` keeping Bc*S*S <= max_rows (MXU-friendly, bounded VMEM)."""
    bc = min(batch, max(1, max_rows // (spatial * spatial)))
    while batch % bc:
        bc -= 1
    return bc


def voxel_head_forward(x_nchw, params, *, dot_dtype=jnp.float32,
                       prob_dtype=jnp.bfloat16, batch_block=None, interpret=False):
    """Single fused pallas_call for the whole voxel head. Returns NHWC logits and probs."""
    conv_params, deconv_w, deconv_b, pred_w, pred_b = params
    B, _, S, S2 = x_nchw.shape
    assert S == S2
    C = deconv_w.shape[-1]
    D = pred_w.shape[-1]
    num_conv = len(conv_params)

    Bc = batch_block or _pick_batch_block(B, S)
    G = B // Bc
    M = Bc * S * S

    x = jnp.transpose(x_nchw, (0, 2, 3, 1))      # NCHW -> NHWC (channels on the lane axis)

    # ---- pack weights into matmul-friendly layouts (tiny; do once / under jit in prod) ----
    kernel_inputs = [x]
    in_specs = [pl.BlockSpec((Bc, S, S, x.shape[-1]), lambda g: (g, 0, 0, 0))]
    conv_in_channels = []
    for (w_hwio, b) in conv_params:
        cin, cout = w_hwio.shape[2], w_hwio.shape[3]
        conv_in_channels.append(cin)
        w_mat = w_hwio.reshape(9 * cin, cout).astype(dot_dtype)   # row = (ky*3+kx)*cin + ci
        kernel_inputs += [w_mat, b.reshape(1, cout).astype(jnp.float32)]
        in_specs += [pl.BlockSpec((9 * cin, cout), lambda g: (0, 0)),
                     pl.BlockSpec((1, cout), lambda g: (0, 0))]

    # deconv (4, Cin, Cout) [k = di*2+dj] -> (Cin, 4*Cout), col = k*Cout + co
    wd = jnp.transpose(deconv_w, (1, 0, 2)).reshape(C, 4 * C).astype(dot_dtype)
    bd = jnp.tile(deconv_b, 4).reshape(1, 4 * C).astype(jnp.float32)
    # predictor (C, D) -> block-diagonal (4*C, 4*D) over the 4 deconv sub-pixels
    wp = jnp.einsum("kl,cd->kcld", jnp.eye(4, dtype=pred_w.dtype), pred_w)
    wp = wp.reshape(4 * C, 4 * D).astype(dot_dtype)
    bp = jnp.tile(pred_b, 4).reshape(1, 4 * D).astype(jnp.float32)
    kernel_inputs += [wd, bd, wp, bp]
    in_specs += [pl.BlockSpec((C, 4 * C), lambda g: (0, 0)),
                 pl.BlockSpec((1, 4 * C), lambda g: (0, 0)),
                 pl.BlockSpec((4 * C, 4 * D), lambda g: (0, 0)),
                 pl.BlockSpec((1, 4 * D), lambda g: (0, 0))]
    # NOTE: weight/bias index_maps are constant -> the Pallas pipeline fetches them once.

    out_shapes = (jax.ShapeDtypeStruct((G, M, 4 * D), jnp.float32),   # logits
                  jax.ShapeDtypeStruct((G, M, 4 * D), prob_dtype))    # sigmoid occupancies
    out_specs = (pl.BlockSpec((1, M, 4 * D), lambda g: (g, 0, 0)),
                 pl.BlockSpec((1, M, 4 * D), lambda g: (g, 0, 0)))
    scratch_shapes = [pltpu.VMEM((Bc, S + 2, S + 2, cin), jnp.float32)
                      for cin in conv_in_channels]

    kernel = _build_voxel_head_kernel(num_conv, Bc, S, dot_dtype)

    logits_flat, probs_flat = pl.pallas_call(
        kernel,
        out_shape=out_shapes,
        grid=(G,),
        in_specs=in_specs,
        out_specs=out_specs,
        scratch_shapes=scratch_shapes,
        compiler_params=pltpu.CompilerParams(
            dimension_semantics=("parallel",),      # shards batch chunks on v7x's 2 TCs
            vmem_limit_bytes=32 * 1024 * 1024,      # raise for production 2048-ch inputs
        ),
        interpret=interpret,
    )(*kernel_inputs)

    # decode kernel packing (b, i, j, (di, dj, d)) back to NHWC spatial layout (free plumbing)
    def decode(flat):
        t = flat.reshape(B, S, S, 2, 2, D)          # (b, i, j, di, dj, d)
        t = jnp.transpose(t, (0, 1, 3, 2, 4, 5))    # (b, i, di, j, dj, d)
        return t.reshape(B, 2 * S, 2 * S, D)

    return decode(logits_flat), decode(probs_flat)


# ----------------------------------------------------------------------------
# MeshRCNNROIHeads (Pallas)
# ----------------------------------------------------------------------------
class MeshRCNNROIHeadsPallas:
    def __init__(self, key, *, in_channels=32, conv_dims=32, num_conv=2,
                 voxel_size=16, cubify_thresh=0.2, voxel_loss_weight=1.0,
                 cls_agnostic_voxel=True, dot_dtype=jnp.float32):
        self.cubify_thresh = cubify_thresh
        self.voxel_loss_weight = voxel_loss_weight
        self.cls_agnostic_voxel = cls_agnostic_voxel
        self.voxel_size = voxel_size
        self.dot_dtype = dot_dtype   # set to jnp.bfloat16 on v6e/v7x for MXU-native matmuls

        keys = jax.random.split(key, num_conv + 2)
        self.conv_params = []
        cin = in_channels
        for i in range(num_conv):
            w = 0.05 * jax.random.normal(keys[i], (3, 3, cin, conv_dims), jnp.float32)
            b = jnp.full((conv_dims,), 0.01, jnp.float32)
            self.conv_params.append((w, b))
            cin = conv_dims
        # transposed conv weights stored as (4, Cin, Cout) with k = di*2 + dj
        self.deconv_w = 0.05 * jax.random.normal(
            keys[num_conv], (4, cin, conv_dims), jnp.float32)
        self.deconv_b = jnp.full((conv_dims,), 0.01, jnp.float32)
        # 1x1 predictor: Cout = voxel depth (class-agnostic)
        self.pred_w = 0.05 * jax.random.normal(
            keys[num_conv + 1], (conv_dims, voxel_size), jnp.float32)
        self.pred_b = jnp.zeros((voxel_size,), jnp.float32)

    # --------------------------------------------------------------
    def forward_voxel(self, feature_dict):
        x_nchw = feature_dict["interpolated"]          # (B, C, S, S) PyTorch layout
        params = (self.conv_params, self.deconv_w, self.deconv_b,
                  self.pred_w, self.pred_b)
        logits_nhwd, probs_nhwd = voxel_head_forward(
            x_nchw, params, dot_dtype=self.dot_dtype)
        # predictor channel == voxel depth -> (B, D, V, V), then add class dim
        pred_voxel = jnp.transpose(logits_nhwd, (0, 3, 1, 2))[:, None]
        vox_probs = jnp.transpose(probs_nhwd, (0, 3, 1, 2))   # sigmoid occupancies (bf16)
        return pred_voxel, vox_probs

    def __call__(self, feature_dict):
        pred_voxel, vox_probs = self.forward_voxel(feature_dict)
        if not self.cls_agnostic_voxel:
            raise ValueError("No support for class specific predictions")
        # TODO(synk): cubify(vox_probs, thresh) and mesh_head refinement produce
        # dynamic-size meshes; no static Pallas equivalent, returning None.
        refined_mesh = None
        return pred_voxel, refined_mesh, vox_probs


# ----------------------------------------------------------------------------
# pure-JAX reference (correctness sanity check)
# ----------------------------------------------------------------------------
def _reference_forward(heads, x_nchw):
    x = jnp.transpose(x_nchw, (0, 2, 3, 1))
    for w, b in heads.conv_params:
        x = jax.lax.conv_general_dilated(
            x, w, window_strides=(1, 1), padding=((1, 1), (1, 1)),
            dimension_numbers=("NHWC", "HWIO", "NHWC"))
        x = jnp.maximum(x + b, 0.0)
    B, H, W, _ = x.shape
    Cout = heads.deconv_w.shape[-1]
    out = jnp.zeros((B, 2 * H, 2 * W, Cout), jnp.float32)
    for di in range(2):
        for dj in range(2):
            sub = jnp.einsum("bhwi,io->bhwo", x, heads.deconv_w[di * 2 + dj])
            out = out.at[:, di::2, dj::2, :].set(sub + heads.deconv_b)
    out = jnp.maximum(out, 0.0)
    logits = jnp.einsum("bhwi,id->bhwd", out, heads.pred_w) + heads.pred_b
    pred_voxel = jnp.transpose(logits, (0, 3, 1, 2))[:, None]
    return pred_voxel, jax.nn.sigmoid(jnp.transpose(logits, (0, 3, 1, 2)))


# ----------------------------------------------------------------------------
if __name__ == "__main__":
    key = jax.random.PRNGKey(0)
    k_feat, k_param = jax.random.split(key)

    B, C_IN, S, V = 2, 32, 8, 16   # small stand-ins (module uses 2048-ch interp feats)
    fkeys = jax.random.split(k_feat, 5)
    feature_dict = {
        # backbone features (only consumed by the (untranslated) mesh head)
        "0": jax.random.normal(fkeys[0], (B, 16, 32, 32), jnp.float32),
        "1": jax.random.normal(fkeys[1], (B, 16, 16, 16), jnp.float32),
        "2": jax.random.normal(fkeys[2], (B, 16, 8, 8), jnp.float32),
        "3": jax.random.normal(fkeys[3], (B, 16, 4, 4), jnp.float32),
        # bilinear-interpolated ROI features, PyTorch NCHW
        "interpolated": jax.random.normal(fkeys[4], (B, C_IN, S, S), jnp.float32),
    }

    heads = MeshRCNNROIHeadsPallas(
        k_param, in_channels=C_IN, conv_dims=32, num_conv=2, voxel_size=V)

    pred_voxel, refined_mesh, vox_probs = heads(feature_dict)
    pred_voxel = jax.block_until_ready(pred_voxel)
    vox_probs = jax.block_until_ready(vox_probs)

    assert pred_voxel.shape == (B, 1, V, V, V), pred_voxel.shape
    assert vox_probs.shape == (B, V, V, V), vox_probs.shape

    ref_voxel, ref_probs = _reference_forward(heads, feature_dict["interpolated"])
    assert jnp.allclose(pred_voxel, ref_voxel, atol=2e-3, rtol=2e-3)
    # probs are written in bf16 by the kernel -> looser tolerance
    assert jnp.allclose(vox_probs.astype(jnp.float32), ref_probs, atol=1e-2, rtol=1e-2)

    print("KERNEL_OK")
</pallas_src>

<mosaic_0001>
module attributes {stable_mosaic.version = 11 : i64} {
  func.func @kernel(%arg0: i32, %arg1: memref<2x8x8x32xf32, #tpu.memory_space<vmem>>, %arg2: memref<288x32xf32, #tpu.memory_space<vmem>>, %arg3: memref<1x32xf32, #tpu.memory_space<vmem>>, %arg4: memref<288x32xf32, #tpu.memory_space<vmem>>, %arg5: memref<1x32xf32, #tpu.memory_space<vmem>>, %arg6: memref<32x128xf32, #tpu.memory_space<vmem>>, %arg7: memref<1x128xf32, #tpu.memory_space<vmem>>, %arg8: memref<128x64xf32, #tpu.memory_space<vmem>>, %arg9: memref<1x64xf32, #tpu.memory_space<vmem>>, %arg10: memref<1x128x64xf32, #tpu.memory_space<vmem>>, %arg11: memref<1x128x64xbf16, #tpu.memory_space<vmem>>, %arg12: memref<2x10x10x32xf32, #tpu.memory_space<vmem>>, %arg13: memref<2x10x10x32xf32, #tpu.memory_space<vmem>>) attributes {dimension_semantics = [#tpu.dimension_semantics<parallel>], iteration_bounds = array<i64: 1>, scalar_prefetch = 0 : i64, scratch_operands = 2 : i64, tpu.core_type = #tpu.core_type<tc>, window_params = [{transform_indices = @transform_0, window_bounds = array<i64: 2, 8, 8, 32>}, {pipeline_mode = #tpu.pipeline_mode<synchronous>, transform_indices = @transform_1, window_bounds = array<i64: 288, 32>}, {pipeline_mode = #tpu.pipeline_mode<synchronous>, transform_indices = @transform_2, window_bounds = array<i64: 1, 32>}, {pipeline_mode = #tpu.pipeline_mode<synchronous>, transform_indices = @transform_3, window_bounds = array<i64: 288, 32>}, {pipeline_mode = #tpu.pipeline_mode<synchronous>, transform_indices = @transform_4, window_bounds = array<i64: 1, 32>}, {pipeline_mode = #tpu.pipeline_mode<synchronous>, transform_indices = @transform_5, window_bounds = array<i64: 32, 128>}, {pipeline_mode = #tpu.pipeline_mode<synchronous>, transform_indices = @transform_6, window_bounds = array<i64: 1, 128>}, {pipeline_mode = #tpu.pipeline_mode<synchronous>, transform_indices = @transform_7, window_bounds = array<i64: 128, 64>}, {pipeline_mode = #tpu.pipeline_mode<synchronous>, transform_indices = @transform_8, window_bounds = array<i64: 1, 64>}, {transform_indices = @transform_9, window_bounds = array<i64: 1, 128, 64>}, {transform_indices = @transform_10, window_bounds = array<i64: 1, 128, 64>}]} {
    %c0 = arith.constant 0 : index
    %c0_0 = arith.constant 0 : index
    %c0_1 = arith.constant 0 : index
    %c0_2 = arith.constant 0 : index
    %0 = vector.load %arg1[%c0, %c0_0, %c0_1, %c0_2] : memref<2x8x8x32xf32, #tpu.memory_space<vmem>>, vector<2x8x8x32xf32>
    %cst = arith.constant 0.000000e+00 : f32
    %1 = vector.broadcast %cst : f32 to vector<2x8x1x32xf32>
    %cst_3 = arith.constant 0.000000e+00 : f32
    %2 = vector.broadcast %cst_3 : f32 to vector<2x1x10x32xf32>
    %3 = tpu.concatenate %1, %0, %1 in 2 : vector<2x8x1x32xf32>, vector<2x8x8x32xf32>, vector<2x8x1x32xf32> -> vector<2x8x10x32xf32>
    %4 = tpu.concatenate %2, %3, %2 in 1 : vector<2x1x10x32xf32>, vector<2x8x10x32xf32>, vector<2x1x10x32xf32> -> vector<2x10x10x32xf32>
    %c0_4 = arith.constant 0 : index
    %c0_5 = arith.constant 0 : index
    %c0_6 = arith.constant 0 : index
    %c0_7 = arith.constant 0 : index
    %5 = vector.load %arg12[%c0_4, %c0_5, %c0_6, %c0_7] : memref<2x10x10x32xf32, #tpu.memory_space<vmem>>, vector<2x10x10x32xf32>
    tpu.vector_store %arg12[%c0_4, %c0_5, %c0_6, %c0_7], %4 {strides = array<i32>} : memref<2x10x10x32xf32, #tpu.memory_space<vmem>>, vector<2x10x10x32xf32>,
    %c0_8 = arith.constant 0 : index
    %c0_9 = arith.constant 0 : index
    %c0_10 = arith.constant 0 : index
    %c0_11 = arith.constant 0 : index
    %6 = vector.load %arg12[%c0_8, %c0_9, %c0_10, %c0_11] : memref<2x10x10x32xf32, #tpu.memory_space<vmem>>, vector<2x8x8x32xf32>
    %7 = vector.shape_cast %6 : vector<2x8x8x32xf32> to vector<128x32xf32>
    %c0_12 = arith.constant 0 : index
    %c0_13 = arith.constant 0 : index
    %c1 = arith.constant 1 : index
    %c0_14 = arith.constant 0 : index
    %8 = vector.load %arg12[%c0_12, %c0_13, %c1, %c0_14] : memref<2x10x10x32xf32, #tpu.memory_space<vmem>>, vector<2x8x8x32xf32>
    %9 = vector.shape_cast %8 : vector<2x8x8x32xf32> to vector<128x32xf32>
    %c0_15 = arith.constant 0 : index
    %c0_16 = arith.constant 0 : index
    %c2 = arith.constant 2 : index
    %c0_17 = arith.constant 0 : index
    %10 = vector.load %arg12[%c0_15, %c0_16, %c2, %c0_17] : memref<2x10x10x32xf32, #tpu.memory_space<vmem>>, vector<2x8x8x32xf32>
    %11 = vector.shape_cast %10 : vector<2x8x8x32xf32> to vector<128x32xf32>
    %c0_18 = arith.constant 0 : index
    %c1_19 = arith.constant 1 : index
    %c0_20 = arith.constant 0 : index
    %c0_21 = arith.constant 0 : index
    %12 = vector.load %arg12[%c0_18, %c1_19, %c0_20, %c0_21] : memref<2x10x10x32xf32, #tpu.memory_space<vmem>>, vector<2x8x8x32xf32>
    %13 = vector.shape_cast %12 : vector<2x8x8x32xf32> to vector<128x32xf32>
    %c0_22 = arith.constant 0 : index
    %c1_23 = arith.constant 1 : index
    %c1_24 = arith.constant 1 : index
    %c0_25 = arith.constant 0 : index
    %14 = vector.load %arg12[%c0_22, %c1_23, %c1_24, %c0_25] : memref<2x10x10x32xf32, #tpu.memory_space<vmem>>, vector<2x8x8x32xf32>
    %15 = vector.shape_cast %14 : vector<2x8x8x32xf32> to vector<128x32xf32>
    %c0_26 = arith.constant 0 : index
    %c1_27 = arith.constant 1 : index
    %c2_28 = arith.constant 2 : index
    %c0_29 = arith.constant 0 : index
    %16 = vector.load %arg12[%c0_26, %c1_27, %c2_28, %c0_29] : memref<2x10x10x32xf32, #tpu.memory_space<vmem>>, vector<2x8x8x32xf32>
    %17 = vector.shape_cast %16 : vector<2x8x8x32xf32> to vector<128x32xf32>
    %c0_30 = arith.constant 0 : index
    %c2_31 = arith.constant 2 : index
    %c0_32 = arith.constant 0 : index
    %c0_33 = arith.constant 0 : index
    %18 = vector.load %arg12[%c0_30, %c2_31, %c0_32, %c0_33] : memref<2x10x10x32xf32, #tpu.memory_space<vmem>>, vector<2x8x8x32xf32>
    %19 = vector.shape_cast %18 : vector<2x8x8x32xf32> to vector<128x32xf32>
    %c0_34 = arith.constant 0 : index
    %c2_35 = arith.constant 2 : index
    %c1_36 = arith.constant 1 : index
    %c0_37 = arith.constant 0 : index
    %20 = vector.load %arg12[%c0_34, %c2_35, %c1_36, %c0_37] : memref<2x10x10x32xf32, #tpu.memory_space<vmem>>, vector<2x8x8x32xf32>
    %21 = vector.shape_cast %20 : vector<2x8x8x32xf32> to vector<128x32xf32>
    %c0_38 = arith.constant 0 : index
    %c2_39 = arith.constant 2 : index
    %c2_40 = arith.constant 2 : index
    %c0_41 = arith.constant 0 : index
    %22 = vector.load %arg12[%c0_38, %c2_39, %c2_40, %c0_41] : memref<2x10x10x32xf32, #tpu.memory_space<vmem>>, vector<2x8x8x32xf32>
    %23 = vector.shape_cast %22 : vector<2x8x8x32xf32> to vector<128x32xf32>
    %24 = tpu.concatenate %7, %9, %11, %13, %15, %17, %19, %21, %23 in 1 : vector<128x32xf32>, vector<128x32xf32>, vector<128x32xf32>, vector<128x32xf32>, vector<128x32xf32>, vector<128x32xf32>, vector<128x32xf32>, vector<128x32xf32>, vector<128x32xf32> -> vector<128x288xf32>
    %c0_42 = arith.constant 0 : index
    %c0_43 = arith.constant 0 : index
    %25 = vector.load %arg2[%c0_42, %c0_43] : memref<288x32xf32, #tpu.memory_space<vmem>>, vector<288x32xf32>
    %cst_44 = arith.constant dense<0.000000e+00> : vector<128x32xf32>
    %26 = tpu.matmul %24, %25, %cst_44 {dimension_numbers = #tpu.dot_dimension_numbers<[1], [0], [0], [1], [0, 0, 1, 1], [], []>} : vector<128x288xf32>, vector<288x32xf32>, vector<128x32xf32> -> vector<128x32xf32>
    %c0_45 = arith.constant 0 : index
    %c0_46 = arith.constant 0 : index
    %27 = vector.load %arg3[%c0_45, %c0_46] : memref<1x32xf32, #tpu.memory_space<vmem>>, vector<1x32xf32>
    %28 = vector.broadcast %27 : vector<1x32xf32> to vector<128x32xf32>
    %29 = arith.addf %26, %28 : vector<128x32xf32>
    %cst_47 = arith.constant 0.000000e+00 : f32
    %30 = vector.broadcast %cst_47 : f32 to vector<128x32xf32>
    %31 = arith.maximumf %29, %30 : vector<128x32xf32>
    %32 = vector.shape_cast %31 : vector<128x32xf32> to vector<2x8x8x32xf32>
    %cst_48 = arith.constant 0.000000e+00 : f32
    %33 = vector.broadcast %cst_48 : f32 to vector<2x8x1x32xf32>
    %cst_49 = arith.constant 0.000000e+00 : f32
    %34 = vector.broadcast %cst_49 : f32 to vector<2x1x10x32xf32>
    %35 = tpu.concatenate %33, %32, %33 in 2 : vector<2x8x1x32xf32>, vector<2x8x8x32xf32>, vector<2x8x1x32xf32> -> vector<2x8x10x32xf32>
    %36 = tpu.concatenate %34, %35, %34 in 1 : vector<2x1x10x32xf32>, vector<2x8x10x32xf32>, vector<2x1x10x32xf32> -> vector<2x10x10x32xf32>
    %c0_50 = arith.constant 0 : index
    %c0_51 = arith.constant 0 : index
    %c0_52 = arith.constant 0 : index
    %c0_53 = arith.constant 0 : index
    %37 = vector.load %arg13[%c0_50, %c0_51, %c0_52, %c0_53] : memref<2x10x10x32xf32, #tpu.memory_space<vmem>>, vector<2x10x10x32xf32>
    tpu.vector_store %arg13[%c0_50, %c0_51, %c0_52, %c0_53], %36 {strides = array<i32>} : memref<2x10x10x32xf32, #tpu.memory_space<vmem>>, vector<2x10x10x32xf32>,
    %c0_54 = arith.constant 0 : index
    %c0_55 = arith.constant 0 : index
    %c0_56 = arith.constant 0 : index
    %c0_57 = arith.constant 0 : index
    %38 = vector.load %arg13[%c0_54, %c0_55, %c0_56, %c0_57] : memref<2x10x10x32xf32, #tpu.memory_space<vmem>>, vector<2x8x8x32xf32>
    %39 = vector.shape_cast %38 : vector<2x8x8x32xf32> to vector<128x32xf32>
    %c0_58 = arith.constant 0 : index
    %c0_59 = arith.constant 0 : index
    %c1_60 = arith.constant 1 : index
    %c0_61 = arith.constant 0 : index
    %40 = vector.load %arg13[%c0_58, %c0_59, %c1_60, %c0_61] : memref<2x10x10x32xf32, #tpu.memory_space<vmem>>, vector<2x8x8x32xf32>
    %41 = vector.shape_cast %40 : vector<2x8x8x32xf32> to vector<128x32xf32>
    %c0_62 = arith.constant 0 : index
    %c0_63 = arith.constant 0 : index
    %c2_64 = arith.constant 2 : index
    %c0_65 = arith.constant 0 : index
    %42 = vector.load %arg13[%c0_62, %c0_63, %c2_64, %c0_65] : memref<2x10x10x32xf32, #tpu.memory_space<vmem>>, vector<2x8x8x32xf32>
    %43 = vector.shape_cast %42 : vector<2x8x8x32xf32> to vector<128x32xf32>
    %c0_66 = arith.constant 0 : index
    %c1_67 = arith.constant 1 : index
    %c0_68 = arith.constant 0 : index
    %c0_69 = arith.constant 0 : index
    %44 = vector.load %arg13[%c0_66, %c1_67, %c0_68, %c0_69] : memref<2x10x10x32xf32, #tpu.memory_space<vmem>>, vector<2x8x8x32xf32>
    %45 = vector.shape_cast %44 : vector<2x8x8x32xf32> to vector<128x32xf32>
    %c0_70 = arith.constant 0 : index
    %c1_71 = arith.constant 1 : index
    %c1_72 = arith.constant 1 : index
    %c0_73 = arith.constant 0 : index
    %46 = vector.load %arg13[%c0_70, %c1_71, %c1_72, %c0_73] : memref<2x10x10x32xf32, #tpu.memory_space<vmem>>, vector<2x8x8x32xf32>
    %47 = vector.shape_cast %46 : vector<2x8x8x32xf32> to vector<128x32xf32>
    %c0_74 = arith.constant 0 : index
    %c1_75 = arith.constant 1 : index
    %c2_76 = arith.constant 2 : index
    %c0_77 = arith.constant 0 : index
    %48 = vector.load %arg13[%c0_74, %c1_75, %c2_76, %c0_77] : memref<2x10x10x32xf32, #tpu.memory_space<vmem>>, vector<2x8x8x32xf32>
    %49 = vector.shape_cast %48 : vector<2x8x8x32xf32> to vector<128x32xf32>
    %c0_78 = arith.constant 0 : index
    %c2_79 = arith.constant 2 : index
    %c0_80 = arith.constant 0 : index
    %c0_81 = arith.constant 0 : index
    %50 = vector.load %arg13[%c0_78, %c2_79, %c0_80, %c0_81] : memref<2x10x10x32xf32, #tpu.memory_space<vmem>>, vector<2x8x8x32xf32>
    %51 = vector.shape_cast %50 : vector<2x8x8x32xf32> to vector<128x32xf32>
    %c0_82 = arith.constant 0 : index
    %c2_83 = arith.constant 2 : index
    %c1_84 = arith.constant 1 : index
    %c0_85 = arith.constant 0 : index
    %52 = vector.load %arg13[%c0_82, %c2_83, %c1_84, %c0_85] : memref<2x10x10x32xf32, #tpu.memory_space<vmem>>, vector<2x8x8x32xf32>
    %53 = vector.shape_cast %52 : vector<2x8x8x32xf32> to vector<128x32xf32>
    %c0_86 = arith.constant 0 : index
    %c2_87 = arith.constant 2 : index
    %c2_88 = arith.constant 2 : index
    %c0_89 = arith.constant 0 : index
    %54 = vector.load %arg13[%c0_86, %c2_87, %c2_88, %c0_89] : memref<2x10x10x32xf32, #tpu.memory_space<vmem>>, vector<2x8x8x32xf32>
    %55 = vector.shape_cast %54 : vector<2x8x8x32xf32> to vector<128x32xf32>
    %56 = tpu.concatenate %39, %41, %43, %45, %47, %49, %51, %53, %55 in 1 : vector<128x32xf32>, vector<128x32xf32>, vector<128x32xf32>, vector<128x32xf32>, vector<128x32xf32>, vector<128x32xf32>, vector<128x32xf32>, vector<128x32xf32>, vector<128x32xf32> -> vector<128x288xf32>
    %c0_90 = arith.constant 0 : index
    %c0_91 = arith.constant 0 : index
    %57 = vector.load %arg4[%c0_90, %c0_91] : memref<288x32xf32, #tpu.memory_space<vmem>>, vector<288x32xf32>
    %cst_92 = arith.constant dense<0.000000e+00> : vector<128x32xf32>
    %58 = tpu.matmul %56, %57, %cst_92 {dimension_numbers = #tpu.dot_dimension_numbers<[1], [0], [0], [1], [0, 0, 1, 1], [], []>} : vector<128x288xf32>, vector<288x32xf32>, vector<128x32xf32> -> vector<128x32xf32>
    %c0_93 = arith.constant 0 : index
    %c0_94 = arith.constant 0 : index
    %59 = vector.load %arg5[%c0_93, %c0_94] : memref<1x32xf32, #tpu.memory_space<vmem>>, vector<1x32xf32>
    %60 = vector.broadcast %59 : vector<1x32xf32> to vector<128x32xf32>
    %61 = arith.addf %58, %60 : vector<128x32xf32>
    %cst_95 = arith.constant 0.000000e+00 : f32
    %62 = vector.broadcast %cst_95 : f32 to vector<128x32xf32>
    %63 = arith.maximumf %61, %62 : vector<128x32xf32>
    %64 = vector.shape_cast %63 : vector<128x32xf32> to vector<2x8x8x32xf32>
    %65 = vector.shape_cast %64 : vector<2x8x8x32xf32> to vector<128x32xf32>
    %c0_96 = arith.constant 0 : index
    %c0_97 = arith.constant 0 : index
    %66 = vector.load %arg6[%c0_96, %c0_97] : memref<32x128xf32, #tpu.memory_space<vmem>>, vector<32x128xf32>
    %cst_98 = arith.constant dense<0.000000e+00> : vector<128x128xf32>
    %67 = tpu.matmul %65, %66, %cst_98 {dimension_numbers = #tpu.dot_dimension_numbers<[1], [0], [0], [1], [0, 0, 1, 1], [], []>} : vector<128x32xf32>, vector<32x128xf32>, vector<128x128xf32> -> vector<128x128xf32>
    %c0_99 = arith.constant 0 : index
    %c0_100 = arith.constant 0 : index
    %68 = vector.load %arg7[%c0_99, %c0_100] : memref<1x128xf32, #tpu.memory_space<vmem>>, vector<1x128xf32>
    %69 = vector.broadcast %68 : vector<1x128xf32> to vector<128x128xf32>
    %70 = arith.addf %67, %69 : vector<128x128xf32>
    %cst_101 = arith.constant 0.000000e+00 : f32
    %71 = vector.broadcast %cst_101 : f32 to vector<128x128xf32>
    %72 = arith.maximumf %70, %71 : vector<128x128xf32>
    %c0_102 = arith.constant 0 : index
    %c0_103 = arith.constant 0 : index
    %73 = vector.load %arg8[%c0_102, %c0_103] : memref<128x64xf32, #tpu.memory_space<vmem>>, vector<128x64xf32>
    %cst_104 = arith.constant dense<0.000000e+00> : vector<128x64xf32>
    %74 = tpu.matmul %72, %73, %cst_104 {dimension_numbers = #tpu.dot_dimension_numbers<[1], [0], [0], [1], [0, 0, 1, 1], [], []>} : vector<128x128xf32>, vector<128x64xf32>, vector<128x64xf32> -> vector<128x64xf32>
    %c0_105 = arith.constant 0 : index
    %c0_106 = arith.constant 0 : index
    %75 = vector.load %arg9[%c0_105, %c0_106] : memref<1x64xf32, #tpu.memory_space<vmem>>, vector<1x64xf32>
    %76 = vector.broadcast %75 : vector<1x64xf32> to vector<128x64xf32>
    %77 = arith.addf %74, %76 : vector<128x64xf32>
    %c0_107 = arith.constant 0 : index
    %c0_108 = arith.constant 0 : index
    %c0_109 = arith.constant 0 : index
    %78 = vector.load %arg10[%c0_107, %c0_108, %c0_109] : memref<1x128x64xf32, #tpu.memory_space<vmem>>, vector<1x128x64xf32>
    %79 = vector.shape_cast %78 : vector<1x128x64xf32> to vector<128x64xf32>
    %80 = vector.shape_cast %77 : vector<128x64xf32> to vector<1x128x64xf32>
    tpu.vector_store %arg10[%c0_107, %c0_108, %c0_109], %80 {strides = array<i32>} : memref<1x128x64xf32, #tpu.memory_space<vmem>>, vector<1x128x64xf32>,
    %81 = arith.negf %77 : vector<128x64xf32>
    %82 = math.exp %81 : vector<128x64xf32>
    %cst_110 = arith.constant 1.000000e+00 : f32
    %83 = vector.broadcast %cst_110 : f32 to vector<128x64xf32>
    %84 = arith.addf %83, %82 : vector<128x64xf32>
    %85 = arith.divf %83, %84 : vector<128x64xf32>
    %86 = arith.truncf %85 : vector<128x64xf32> to vector<128x64xbf16>
    %c0_111 = arith.constant 0 : index
    %c0_112 = arith.constant 0 : index
    %c0_113 = arith.constant 0 : index
    %87 = vector.load %arg11[%c0_111, %c0_112, %c0_113] : memref<1x128x64xbf16, #tpu.memory_space<vmem>>, vector<1x128x64xbf16>
    %88 = vector.shape_cast %87 : vector<1x128x64xbf16> to vector<128x64xbf16>
    %89 = vector.shape_cast %86 : vector<128x64xbf16> to vector<1x128x64xbf16>
    tpu.vector_store %arg11[%c0_111, %c0_112, %c0_113], %89 {strides = array<i32>} : memref<1x128x64xbf16, #tpu.memory_space<vmem>>, vector<1x128x64xbf16>,
    return
  }
  func.func @transform_0(%arg0: i32) -> (i32, i32, i32, i32) {
    %c0_i32 = arith.constant 0 : i32
    %c0_i32_0 = arith.constant 0 : i32
    %c0_i32_1 = arith.constant 0 : i32
    %c0_i32_2 = arith.constant 0 : i32
    return %arg0, %c0_i32, %c0_i32_0, %c0_i32_1 : i32, i32, i32, i32
  }
  func.func @transform_1(%arg0: i32) -> (i32, i32) {
    %c0_i32 = arith.constant 0 : i32
    %c0_i32_0 = arith.constant 0 : i32
    %c0_i32_1 = arith.constant 0 : i32
    return %c0_i32, %c0_i32_0 : i32, i32
  }
  func.func @transform_2(%arg0: i32) -> (i32, i32) {
    %c0_i32 = arith.constant 0 : i32
    %c0_i32_0 = arith.constant 0 : i32
    %c0_i32_1 = arith.constant 0 : i32
    return %c0_i32, %c0_i32_0 : i32, i32
  }
  func.func @transform_3(%arg0: i32) -> (i32, i32) {
    %c0_i32 = arith.constant 0 : i32
    %c0_i32_0 = arith.constant 0 : i32
    %c0_i32_1 = arith.constant 0 : i32
    return %c0_i32, %c0_i32_0 : i32, i32
  }
  func.func @transform_4(%arg0: i32) -> (i32, i32) {
    %c0_i32 = arith.constant 0 : i32
    %c0_i32_0 = arith.constant 0 : i32
    %c0_i32_1 = arith.constant 0 : i32
    return %c0_i32, %c0_i32_0 : i32, i32
  }
  func.func @transform_5(%arg0: i32) -> (i32, i32) {
    %c0_i32 = arith.constant 0 : i32
    %c0_i32_0 = arith.constant 0 : i32
    %c0_i32_1 = arith.constant 0 : i32
    return %c0_i32, %c0_i32_0 : i32, i32
  }
  func.func @transform_6(%arg0: i32) -> (i32, i32) {
    %c0_i32 = arith.constant 0 : i32
    %c0_i32_0 = arith.constant 0 : i32
    %c0_i32_1 = arith.constant 0 : i32
    return %c0_i32, %c0_i32_0 : i32, i32
  }
  func.func @transform_7(%arg0: i32) -> (i32, i32) {
    %c0_i32 = arith.constant 0 : i32
    %c0_i32_0 = arith.constant 0 : i32
    %c0_i32_1 = arith.constant 0 : i32
    return %c0_i32, %c0_i32_0 : i32, i32
  }
  func.func @transform_8(%arg0: i32) -> (i32, i32) {
    %c0_i32 = arith.constant 0 : i32
    %c0_i32_0 = arith.constant 0 : i32
    %c0_i32_1 = arith.constant 0 : i32
    return %c0_i32, %c0_i32_0 : i32, i32
  }
  func.func @transform_9(%arg0: i32) -> (i32, i32, i32) {
    %c0_i32 = arith.constant 0 : i32
    %c0_i32_0 = arith.constant 0 : i32
    %c0_i32_1 = arith.constant 0 : i32
    return %arg0, %c0_i32, %c0_i32_0 : i32, i32, i32
  }
  func.func @transform_10(%arg0: i32) -> (i32, i32, i32) {
    %c0_i32 = arith.constant 0 : i32
    %c0_i32_0 = arith.constant 0 : i32
    %c0_i32_1 = arith.constant 0 : i32
    return %arg0, %c0_i32, %c0_i32_0 : i32, i32, i32
  }
}

</mosaic_0001>

<llo_original>
// kernel: tpu_custom_call.1
$region0: #{tpu_custom_call.1}
  #allocation0 [shape = 'u32[]', space=smem, size = 0x4, offset = 0x4, fixed_abs, tag = 'smem constant byte address 0x4 - core index']
  #allocation1 [shape = 'u32[72,128]{1,0:T(1,128)}', space=vmem, size = 0x9000, scoped, tag = 'internal scratch']
  #allocation2 [shape = 'f32[2,10,10,32]{3,2,1,0:T(8,128)}', space=vmem, size = 0x28000, scoped, tag = 'scratch operand']
  #allocation3 [shape = 'f32[2,10,10,32]{3,2,1,0:T(8,128)}', space=vmem, size = 0x28000, scoped, tag = 'scratch operand']
  %s0 = inlined_call_operand.vmem [shape: f32[2,8,8,32], index: 0, kind: input, shape index: {}]
  %s1 = inlined_call_operand.vmem [shape: f32[288,32], index: 1, kind: input, shape index: {}]
  %s2 = inlined_call_operand.vmem [shape: f32[1,32], index: 2, kind: input, shape index: {}]
  %s3 = inlined_call_operand.vmem [shape: f32[288,32], index: 3, kind: input, shape index: {}]
  %s4 = inlined_call_operand.vmem [shape: f32[1,32], index: 4, kind: input, shape index: {}]
  %s5 = inlined_call_operand.vmem [shape: f32[32,128], index: 5, kind: input, shape index: {}]
  %s6 = inlined_call_operand.vmem [shape: f32[1,128], index: 6, kind: input, shape index: {}]
  %s7 = inlined_call_operand.vmem [shape: f32[128,64], index: 7, kind: input, shape index: {}]
  %s8 = inlined_call_operand.vmem [shape: f32[1,64], index: 8, kind: input, shape index: {}]
  %s9 = inlined_call_operand.vmem [shape: f32[1,128,64], index: 9, kind: output, shape index: {0}]
  %s10 = inlined_call_operand.vmem [shape: bf16[1,128,64], index: 10, kind: output, shape index: {1}]
  %11 = xla_tuple %s9, %s10
  %s12 = sld [smem:[#allocation0]]
  $region54: #{tpu_custom_call.1} parent=0
    _
  %s14 = ssub.s32 1, %s12
  %s15 = scalar_select 0, %s14, %s12
  // Predicated region
  $region2: #{tpu_custom_call.1} parent=0 // pred_check
    _
  $region3: #{tpu_custom_call.1} parent=0 // pred_check_branch
    %17 = sbr.rel (0) target = $region5
  $region4: #{tpu_custom_call.1} parent=0 // pred_region
    _
  $region5: #{tpu_custom_call.1} parent=0 // pred_fallthru
    _
  // Predicated region
  $region6: #{tpu_custom_call.1} parent=0 // pred_check
    _
  $region7: #{tpu_custom_call.1} parent=0 // pred_check_branch
    %19 = sbr.rel (0) target = $region9
  $region8: #{tpu_custom_call.1} parent=0 // pred_region
    _
  $region9: #{tpu_custom_call.1} parent=0 // pred_fallthru
    _
  // Predicated region
  $region10: #{tpu_custom_call.1} parent=0 // pred_check
    _
  $region11: #{tpu_custom_call.1} parent=0 // pred_check_branch
    %21 = sbr.rel (0) target = $region13
  $region12: #{tpu_custom_call.1} parent=0 // pred_region
    _
  $region13: #{tpu_custom_call.1} parent=0 // pred_fallthru
    _
  // Predicated region
  $region14: #{tpu_custom_call.1} parent=0 // pred_check
    _
  $region15: #{tpu_custom_call.1} parent=0 // pred_check_branch
    %23 = sbr.rel (0) target = $region17
  $region16: #{tpu_custom_call.1} parent=0 // pred_region
    _
  $region17: #{tpu_custom_call.1} parent=0 // pred_fallthru
    _
  // Predicated region
  $region18: #{tpu_custom_call.1} parent=0 // pred_check
    _
  $region19: #{tpu_custom_call.1} parent=0 // pred_check_branch
    %25 = sbr.rel (0) target = $region21
  $region20: #{tpu_custom_call.1} parent=0 // pred_region
    _
  $region21: #{tpu_custom_call.1} parent=0 // pred_fallthru
    _
  // Predicated region
  $region22: #{tpu_custom_call.1} parent=0 // pred_check
    _
  $region23: #{tpu_custom_call.1} parent=0 // pred_check_branch
    %27 = sbr.rel (0) target = $region25
  $region24: #{tpu_custom_call.1} parent=0 // pred_region
    _
  $region25: #{tpu_custom_call.1} parent=0 // pred_fallthru
    _
  // Predicated region
  $region26: #{tpu_custom_call.1} parent=0 // pred_check
    _
  $region27: #{tpu_custom_call.1} parent=0 // pred_check_branch
    %29 = sbr.rel (0) target = $region29
  $region28: #{tpu_custom_call.1} parent=0 // pred_region
    _
  $region29: #{tpu_custom_call.1} parent=0 // pred_fallthru
    _
  // Predicated region
  $region30: #{tpu_custom_call.1} parent=0 // pred_check
    _
  $region31: #{tpu_custom_call.1} parent=0 // pred_check_branch
    %31 = sbr.rel (0) target = $region33
  $region32: #{tpu_custom_call.1} parent=0 // pred_region
    _
  $region33: #{tpu_custom_call.1} parent=0 // pred_fallthru
    _
  // Predicated region
  $region34: #{tpu_custom_call.1} parent=0 // pred_check
    _
  $region35: #{tpu_custom_call.1} parent=0 // pred_check_branch
    %33 = sbr.rel (0) target = $region37
  $region36: #{tpu_custom_call.1} parent=0 // pred_region
    _
  $region37: #{tpu_custom_call.1} parent=0 // pred_fallthru
    _
  %v34 = vld [vmem:[%s0] sm:$0xff]
  %v35 = vld [vmem:[%s0 + $0x8] sm:$0xff]
  %v36 = vld [vmem:[%s0 + $0x10] sm:$0xff]
  %v37 = vld [vmem:[%s0 + $0x18] sm:$0xff]
  %v38 = vld [vmem:[%s0 + $0x20] sm:$0xff]
  %v39 = vld [vmem:[%s0 + $0x28] sm:$0xff]
  %v40 = vld [vmem:[%s0 + $0x30] sm:$0xff]
  %v41 = vld [vmem:[%s0 + $0x38] sm:$0xff]
  %v42 = vld [vmem:[%s0 + $0x40] sm:$0xff]
  %v43 = vld [vmem:[%s0 + $0x48] sm:$0xff]
  %v44 = vld [vmem:[%s0 + $0x50] sm:$0xff]
  %v45 = vld [vmem:[%s0 + $0x58] sm:$0xff]
  %v46 = vld [vmem:[%s0 + $0x60] sm:$0xff]
  %v47 = vld [vmem:[%s0 + $0x68] sm:$0xff]
  %v48 = vld [vmem:[%s0 + $0x70] sm:$0xff]
  %v49 = vld [vmem:[%s0 + $0x78] sm:$0xff]
  %v66 = vrot.slane %v34, 7
  %v67 = vrot.slane %v35, 7
  %v68 = vrot.slane %v36, 7
  %v69 = vrot.slane %v37, 7
  %v70 = vrot.slane %v38, 7
  %v71 = vrot.slane %v39, 7
  %v72 = vrot.slane %v40, 7
  %v73 = vrot.slane %v41, 7
  %v74 = vrot.slane %v42, 7
  %v75 = vrot.slane %v43, 7
  %v76 = vrot.slane %v44, 7
  %v77 = vrot.slane %v45, 7
  %v78 = vrot.slane %v46, 7
  %v79 = vrot.slane %v47, 7
  %v80 = vrot.slane %v48, 7
  %v81 = vrot.slane %v49, 7
  %vm98 = vcmask 1040384
  %v99 = vsel %vm98, 0.0, %v66
  %v100 = vsel %vm98, 0.0, %v67
  %v101 = vsel %vm98, 0.0, %v68
  %v102 = vsel %vm98, 0.0, %v69
  %v103 = vsel %vm98, 0.0, %v70
  %v104 = vsel %vm98, 0.0, %v71
  %v105 = vsel %vm98, 0.0, %v72
  %v106 = vsel %vm98, 0.0, %v73
  %v107 = vsel %vm98, 0.0, %v74
  %v108 = vsel %vm98, 0.0, %v75
  %v109 = vsel %vm98, 0.0, %v76
  %v110 = vsel %vm98, 0.0, %v77
  %v111 = vsel %vm98, 0.0, %v78
  %v112 = vsel %vm98, 0.0, %v79
  %v113 = vsel %vm98, 0.0, %v80
  %v114 = vsel %vm98, 0.0, %v81
  %v115 = vsel %vm98, %v66, 0.0
  %v116 = vsel %vm98, %v67, 0.0
  %v117 = vsel %vm98, %v68, 0.0
  %v118 = vsel %vm98, %v69, 0.0
  %v119 = vsel %vm98, %v70, 0.0
  %v120 = vsel %vm98, %v71, 0.0
  %v121 = vsel %vm98, %v72, 0.0
  %v122 = vsel %vm98, %v73, 0.0
  %v123 = vsel %vm98, %v74, 0.0
  %v124 = vsel %vm98, %v75, 0.0
  %v125 = vsel %vm98, %v76, 0.0
  %v126 = vsel %vm98, %v77, 0.0
  %v127 = vsel %vm98, %v78, 0.0
  %v128 = vsel %vm98, %v79, 0.0
  %v129 = vsel %vm98, %v80, 0.0
  %v130 = vsel %vm98, %v81, 0.0
  %vm131 = vcmask 261120
  %132 = vst.msk [vmem:[#allocation2] sm:$0xff] %vm131, 0.0
  %vm133 = vcmask 254976
  %134 = vst.msk [vmem:[#allocation2 + $0x8] sm:$0x3] %vm133, 0.0
  %135 = vst.msk [vmem:[#allocation2 + $0x10] sm:$0xff] %vm131, %v99
  %136 = vst.msk [vmem:[#allocation2 + $0x18] sm:$0x3] %vm133, %v115
  %137 = vst.msk [vmem:[#allocation2 + $0x20] sm:$0xff] %vm131, %v100
  %138 = vst.msk [vmem:[#allocation2 + $0x28] sm:$0x3] %vm133, %v116
  %139 = vst.msk [vmem:[#allocation2 + $0x30] sm:$0xff] %vm131, %v101
  %140 = vst.msk [vmem:[#allocation2 + $0x38] sm:$0x3] %vm133, %v117
  %141 = vst.msk [vmem:[#allocation2 + $0x40] sm:$0xff] %vm131, %v102
  %142 = vst.msk [vmem:[#allocation2 + $0x48] sm:$0x3] %vm133, %v118
  %143 = vst.msk [vmem:[#allocation2 + $0x50] sm:$0xff] %vm131, %v103
  %144 = vst.msk [vmem:[#allocation2 + $0x58] sm:$0x3] %vm133, %v119
  %145 = vst.msk [vmem:[#allocation2 + $0x60] sm:$0xff] %vm131, %v104
  %146 = vst.msk [vmem:[#allocation2 + $0x68] sm:$0x3] %vm133, %v120
  %147 = vst.msk [vmem:[#allocation2 + $0x70] sm:$0xff] %vm131, %v105
  %148 = vst.msk [vmem:[#allocation2 + $0x78] sm:$0x3] %vm133, %v121
  %149 = vst.msk [vmem:[#allocation2 + $0x80] sm:$0xff] %vm131, %v106
  %150 = vst.msk [vmem:[#allocation2 + $0x88] sm:$0x3] %vm133, %v122
  %151 = vst.msk [vmem:[#allocation2 + $0x90] sm:$0xff] %vm131, 0.0
  %152 = vst.msk [vmem:[#allocation2 + $0x98] sm:$0x3] %vm133, 0.0
  %153 = vst.msk [vmem:[#allocation2 + $0xa0] sm:$0xff] %vm131, 0.0
  %154 = vst.msk [vmem:[#allocation2 + $0xa8] sm:$0x3] %vm133, 0.0
  %155 = vst.msk [vmem:[#allocation2 + $0xb0] sm:$0xff] %vm131, %v107
  %156 = vst.msk [vmem:[#allocation2 + $0xb8] sm:$0x3] %vm133, %v123
  %157 = vst.msk [vmem:[#allocation2 + $0xc0] sm:$0xff] %vm131, %v108
  %158 = vst.msk [vmem:[#allocation2 + $0xc8] sm:$0x3] %vm133, %v124
  %159 = vst.msk [vmem:[#allocation2 + $0xd0] sm:$0xff] %vm131, %v109
  %160 = vst.msk [vmem:[#allocation2 + $0xd8] sm:$0x3] %vm133, %v125
  %161 = vst.msk [vmem:[#allocation2 + $0xe0] sm:$0xff] %vm131, %v110
  %162 = vst.msk [vmem:[#allocation2 + $0xe8] sm:$0x3] %vm133, %v126
  %163 = vst.msk [vmem:[#allocation2 + $0xf0] sm:$0xff] %vm131, %v111
  %164 = vst.msk [vmem:[#allocation2 + $0xf8] sm:$0x3] %vm133, %v127
  %165 = vst.msk [vmem:[#allocation2 + $0x100] sm:$0xff] %vm131, %v112
  %166 = vst.msk [vmem:[#allocation2 + $0x108] sm:$0x3] %vm133, %v128
  %167 = vst.msk [vmem:[#allocation2 + $0x110] sm:$0xff] %vm131, %v113
  %168 = vst.msk [vmem:[#allocation2 + $0x118] sm:$0x3] %vm133, %v129
  %169 = vst.msk [vmem:[#allocation2 + $0x120] sm:$0xff] %vm131, %v114
  %170 = vst.msk [vmem:[#allocation2 + $0x128] sm:$0x3] %vm133, %v130
  %171 = vst.msk [vmem:[#allocation2 + $0x130] sm:$0xff] %vm131, 0.0
  %172 = vst.msk [vmem:[#allocation2 + $0x138] sm:$0x3] %vm133, 0.0
  %v173 = vld [vmem:[#allocation2] sm:$0xff]
  %v174 = vld [vmem:[#allocation2 + $0x10] sm:$0xff]
  %v175 = vld [vmem:[#allocation2 + $0x20] sm:$0xff]
  %v176 = vld [vmem:[#allocation2 + $0x30] sm:$0xff]
  %v177 = vld [vmem:[#allocation2 + $0x40] sm:$0xff]
  %v178 = vld [vmem:[#allocation2 + $0x50] sm:$0xff]
  %v179 = vld [vmem:[#allocation2 + $0x60] sm:$0xff]
  %v180 = vld [vmem:[#allocation2 + $0x70] sm:$0xff]
  %v181 = vld [vmem:[#allocation2 + $0xa0] sm:$0xff]
  %v182 = vld [vmem:[#allocation2 + $0xb0] sm:$0xff]
  %v183 = vld [vmem:[#allocation2 + $0xc0] sm:$0xff]
  %v184 = vld [vmem:[#allocation2 + $0xd0] sm:$0xff]
  %v185 = vld [vmem:[#allocation2 + $0xe0] sm:$0xff]
  %v186 = vld [vmem:[#allocation2 + $0xf0] sm:$0xff]
  %v187 = vld [vmem:[#allocation2 + $0x100] sm:$0xff]
  %v188 = vld [vmem:[#allocation2 + $0x110] sm:$0xff]
  %v189 = vld [vmem:[#allocation2 + $0x1] sm:$0xff]
  %v190 = vld [vmem:[#allocation2 + $0x11] sm:$0xff]
  %v191 = vld [vmem:[#allocation2 + $0x21] sm:$0xff]
  %v192 = vld [vmem:[#allocation2 + $0x31] sm:$0xff]
  %v193 = vld [vmem:[#allocation2 + $0x41] sm:$0xff]
  %v194 = vld [vmem:[#allocation2 + $0x51] sm:$0xff]
  %v195 = vld [vmem:[#allocation2 + $0x61] sm:$0xff]
  %v196 = vld [vmem:[#allocation2 + $0x71] sm:$0xff]
  %v197 = vld [vmem:[#allocation2 + $0xa1] sm:$0xff]
  %v198 = vld [vmem:[#allocation2 + $0xb1] sm:$0xff]
  %v199 = vld [vmem:[#allocation2 + $0xc1] sm:$0xff]
  %v200 = vld [vmem:[#allocation2 + $0xd1] sm:$0xff]
  %v201 = vld [vmem:[#allocation2 + $0xe1] sm:$0xff]
  %v202 = vld [vmem:[#allocation2 + $0xf1] sm:$0xff]
  %v203 = vld [vmem:[#allocation2 + $0x101] sm:$0xff]
  %v204 = vld [vmem:[#allocation2 + $0x111] sm:$0xff]
  %v205 = vld [vmem:[#allocation2 + $0x2] sm:$0xff]
  %v206 = vld [vmem:[#allocation2 + $0x12] sm:$0xff]
  %v207 = vld [vmem:[#allocation2 + $0x22] sm:$0xff]
  %v208 = vld [vmem:[#allocation2 + $0x32] sm:$0xff]
  %v209 = vld [vmem:[#allocation2 + $0x42] sm:$0xff]
  %v210 = vld [vmem:[#allocation2 + $0x52] sm:$0xff]
  %v211 = vld [vmem:[#allocation2 + $0x62] sm:$0xff]
  %v212 = vld [vmem:[#allocation2 + $0x72] sm:$0xff]
  %v213 = vld [vmem:[#allocation2 + $0xa2] sm:$0xff]
  %v214 = vld [vmem:[#allocation2 + $0xb2] sm:$0xff]
  %v215 = vld [vmem:[#allocation2 + $0xc2] sm:$0xff]
  %v216 = vld [vmem:[#allocation2 + $0xd2] sm:$0xff]
  %v217 = vld [vmem:[#allocation2 + $0xe2] sm:$0xff]
  %v218 = vld [vmem:[#allocation2 + $0xf2] sm:$0xff]
  %v219 = vld [vmem:[#allocation2 + $0x102] sm:$0xff]
  %v220 = vld [vmem:[#allocation2 + $0x112] sm:$0xff]
  %s221 = scalar_lea.vmem [#allocation2], 16
  %v222 = vld [vmem:[%s221] sm:$0xff]
  %v223 = vld [vmem:[%s221 + $0x10] sm:$0xff]
  %v224 = vld [vmem:[%s221 + $0x20] sm:$0xff]
  %v225 = vld [vmem:[%s221 + $0x30] sm:$0xff]
  %v226 = vld [vmem:[%s221 + $0x40] sm:$0xff]
  %v227 = vld [vmem:[%s221 + $0x50] sm:$0xff]
  %v228 = vld [vmem:[%s221 + $0x60] sm:$0xff]
  %v229 = vld [vmem:[%s221 + $0x70] sm:$0xff]
  %v230 = vld [vmem:[%s221 + $0xa0] sm:$0xff]
  %v231 = vld [vmem:[%s221 + $0xb0] sm:$0xff]
  %v232 = vld [vmem:[%s221 + $0xc0] sm:$0xff]
  %v233 = vld [vmem:[%s221 + $0xd0] sm:$0xff]
  %v234 = vld [vmem:[%s221 + $0xe0] sm:$0xff]
  %v235 = vld [vmem:[%s221 + $0xf0] sm:$0xff]
  %v236 = vld [vmem:[%s221 + $0x100] sm:$0xff]
  %v237 = vld [vmem:[%s221 + $0x110] sm:$0xff]
  %v238 = vld [vmem:[%s221 + $0x1] sm:$0xff]
  %v239 = vld [vmem:[%s221 + $0x11] sm:$0xff]
  %v240 = vld [vmem:[%s221 + $0x21] sm:$0xff]
  %v241 = vld [vmem:[%s221 + $0x31] sm:$0xff]
  %v242 = vld [vmem:[%s221 + $0x41] sm:$0xff]
  %v243 = vld [vmem:[%s221 + $0x51] sm:$0xff]
  %v244 = vld [vmem:[%s221 + $0x61] sm:$0xff]
  %v245 = vld [vmem:[%s221 + $0x71] sm:$0xff]
  %v246 = vld [vmem:[%s221 + $0xa1] sm:$0xff]
  %v247 = vld [vmem:[%s221 + $0xb1] sm:$0xff]
  %v248 = vld [vmem:[%s221 + $0xc1] sm:$0xff]
  %v249 = vld [vmem:[%s221 + $0xd1] sm:$0xff]
  %v250 = vld [vmem:[%s221 + $0xe1] sm:$0xff]
  %v251 = vld [vmem:[%s221 + $0xf1] sm:$0xff]
  %v252 = vld [vmem:[%s221 + $0x101] sm:$0xff]
  %v253 = vld [vmem:[%s221 + $0x111] sm:$0xff]
  %v254 = vld [vmem:[%s221 + $0x2] sm:$0xff]
  %v255 = vld [vmem:[%s221 + $0x12] sm:$0xff]
  %v256 = vld [vmem:[%s221 + $0x22] sm:$0xff]
  %v257 = vld [vmem:[%s221 + $0x32] sm:$0xff]
  %v258 = vld [vmem:[%s221 + $0x42] sm:$0xff]
  %v259 = vld [vmem:[%s221 + $0x52] sm:$0xff]
  %v260 = vld [vmem:[%s221 + $0x62] sm:$0xff]
  %v261 = vld [vmem:[%s221 + $0x72] sm:$0xff]
  %v262 = vld [vmem:[%s221 + $0xa2] sm:$0xff]
  %v263 = vld [vmem:[%s221 + $0xb2] sm:$0xff]
  %v264 = vld [vmem:[%s221 + $0xc2] sm:$0xff]
  %v265 = vld [vmem:[%s221 + $0xd2] sm:$0xff]
  %v266 = vld [vmem:[%s221 + $0xe2] sm:$0xff]
  %v267 = vld [vmem:[%s221 + $0xf2] sm:$0xff]
  %v268 = vld [vmem:[%s221 + $0x102] sm:$0xff]
  %v269 = vld [vmem:[%s221 + $0x112] sm:$0xff]
  %s270 = scalar_lea.vmem [#allocation2], 32
  %v271 = vld [vmem:[%s270] sm:$0xff]
  %v272 = vld [vmem:[%s270 + $0x10] sm:$0xff]
  %v273 = vld [vmem:[%s270 + $0x20] sm:$0xff]
  %v274 = vld [vmem:[%s270 + $0x30] sm:$0xff]
  %v275 = vld [vmem:[%s270 + $0x40] sm:$0xff]
  %v276 = vld [vmem:[%s270 + $0x50] sm:$0xff]
  %v277 = vld [vmem:[%s270 + $0x60] sm:$0xff]
  %v278 = vld [vmem:[%s270 + $0x70] sm:$0xff]
  %v279 = vld [vmem:[%s270 + $0xa0] sm:$0xff]
  %v280 = vld [vmem:[%s270 + $0xb0] sm:$0xff]
  %v281 = vld [vmem:[%s270 + $0xc0] sm:$0xff]
  %v282 = vld [vmem:[%s270 + $0xd0] sm:$0xff]
  %v283 = vld [vmem:[%s270 + $0xe0] sm:$0xff]
  %v284 = vld [vmem:[%s270 + $0xf0] sm:$0xff]
  %v285 = vld [vmem:[%s270 + $0x100] sm:$0xff]
  %v286 = vld [vmem:[%s270 + $0x110] sm:$0xff]
  %v287 = vld [vmem:[%s270 + $0x1] sm:$0xff]
  %v288 = vld [vmem:[%s270 + $0x11] sm:$0xff]
  %v289 = vld [vmem:[%s270 + $0x21] sm:$0xff]
  %v290 = vld [vmem:[%s270 + $0x31] sm:$0xff]
  %v291 = vld [vmem:[%s270 + $0x41] sm:$0xff]
  %v292 = vld [vmem:[%s270 + $0x51] sm:$0xff]
  %v293 = vld [vmem:[%s270 + $0x61] sm:$0xff]
  %v294 = vld [vmem:[%s270 + $0x71] sm:$0xff]
  %v295 = vld [vmem:[%s270 + $0xa1] sm:$0xff]
  %v296 = vld [vmem:[%s270 + $0xb1] sm:$0xff]
  %v297 = vld [vmem:[%s270 + $0xc1] sm:$0xff]
  %v298 = vld [vmem:[%s270 + $0xd1] sm:$0xff]
  %v299 = vld [vmem:[%s270 + $0xe1] sm:$0xff]
  %v300 = vld [vmem:[%s270 + $0xf1] sm:$0xff]
  %v301 = vld [vmem:[%s270 + $0x101] sm:$0xff]
  %v302 = vld [vmem:[%s270 + $0x111] sm:$0xff]
  %v303 = vld [vmem:[%s270 + $0x2] sm:$0xff]
  %v304 = vld [vmem:[%s270 + $0x12] sm:$0xff]
  %v305 = vld [vmem:[%s270 + $0x22] sm:$0xff]
  %v306 = vld [vmem:[%s270 + $0x32] sm:$0xff]
  %v307 = vld [vmem:[%s270 + $0x42] sm:$0xff]
  %v308 = vld [vmem:[%s270 + $0x52] sm:$0xff]
  %v309 = vld [vmem:[%s270 + $0x62] sm:$0xff]
  %v310 = vld [vmem:[%s270 + $0x72] sm:$0xff]
  %v311 = vld [vmem:[%s270 + $0xa2] sm:$0xff]
  %v312 = vld [vmem:[%s270 + $0xb2] sm:$0xff]
  %v313 = vld [vmem:[%s270 + $0xc2] sm:$0xff]
  %v314 = vld [vmem:[%s270 + $0xd2] sm:$0xff]
  %v315 = vld [vmem:[%s270 + $0xe2] sm:$0xff]
  %v316 = vld [vmem:[%s270 + $0xf2] sm:$0xff]
  %v317 = vld [vmem:[%s270 + $0x102] sm:$0xff]
  %v318 = vld [vmem:[%s270 + $0x112] sm:$0xff]
  %335 = vrot.lane.b32.xlu0 %v189, 32
  %v336 = vpop.permute.xlu0 %335
  %337 = vrot.lane.b32.xlu0 %v190, 32
  %v338 = vpop.permute.xlu0 %337
  %339 = vrot.lane.b32.xlu0 %v191, 32
  %v340 = vpop.permute.xlu0 %339
  %341 = vrot.lane.b32.xlu0 %v192, 32
  %v342 = vpop.permute.xlu0 %341
  %343 = vrot.lane.b32.xlu0 %v193, 32
  %v344 = vpop.permute.xlu0 %343
  %345 = vrot.lane.b32.xlu0 %v194, 32
  %v346 = vpop.permute.xlu0 %345
  %347 = vrot.lane.b32.xlu0 %v195, 32
  %v348 = vpop.permute.xlu0 %347
  %349 = vrot.lane.b32.xlu0 %v196, 32
  %v350 = vpop.permute.xlu0 %349
  %351 = vrot.lane.b32.xlu0 %v197, 32
  %v352 = vpop.permute.xlu0 %351
  %353 = vrot.lane.b32.xlu0 %v198, 32
  %v354 = vpop.permute.xlu0 %353
  %355 = vrot.lane.b32.xlu0 %v199, 32
  %v356 = vpop.permute.xlu0 %355
  %357 = vrot.lane.b32.xlu0 %v200, 32
  %v358 = vpop.permute.xlu0 %357
  %359 = vrot.lane.b32.xlu0 %v201, 32
  %v360 = vpop.permute.xlu0 %359
  %361 = vrot.lane.b32.xlu0 %v202, 32
  %v362 = vpop.permute.xlu0 %361
  %363 = vrot.lane.b32.xlu0 %v203, 32
  %v364 = vpop.permute.xlu0 %363
  %365 = vrot.lane.b32.xlu0 %v204, 32
  %v366 = vpop.permute.xlu0 %365
  %399 = vrot.lane.b32.xlu0 %v205, 64
  %v400 = vpop.permute.xlu0 %399
  %401 = vrot.lane.b32.xlu0 %v206, 64
  %v402 = vpop.permute.xlu0 %401
  %403 = vrot.lane.b32.xlu0 %v207, 64
  %v404 = vpop.permute.xlu0 %403
  %405 = vrot.lane.b32.xlu0 %v208, 64
  %v406 = vpop.permute.xlu0 %405
  %407 = vrot.lane.b32.xlu0 %v209, 64
  %v408 = vpop.permute.xlu0 %407
  %409 = vrot.lane.b32.xlu0 %v210, 64
  %v410 = vpop.permute.xlu0 %409
  %411 = vrot.lane.b32.xlu0 %v211, 64
  %v412 = vpop.permute.xlu0 %411
  %413 = vrot.lane.b32.xlu0 %v212, 64
  %v414 = vpop.permute.xlu0 %413
  %415 = vrot.lane.b32.xlu0 %v213, 64
  %v416 = vpop.permute.xlu0 %415
  %417 = vrot.lane.b32.xlu0 %v214, 64
  %v418 = vpop.permute.xlu0 %417
  %419 = vrot.lane.b32.xlu0 %v215, 64
  %v420 = vpop.permute.xlu0 %419
  %421 = vrot.lane.b32.xlu0 %v216, 64
  %v422 = vpop.permute.xlu0 %421
  %423 = vrot.lane.b32.xlu0 %v217, 64
  %v424 = vpop.permute.xlu0 %423
  %425 = vrot.lane.b32.xlu0 %v218, 64
  %v426 = vpop.permute.xlu0 %425
  %427 = vrot.lane.b32.xlu0 %v219, 64
  %v428 = vpop.permute.xlu0 %427
  %429 = vrot.lane.b32.xlu0 %v220, 64
  %v430 = vpop.permute.xlu0 %429
  %463 = vrot.lane.b32.xlu0 %v222, 96
  %v464 = vpop.permute.xlu0 %463
  %465 = vrot.lane.b32.xlu0 %v223, 96
  %v466 = vpop.permute.xlu0 %465
  %467 = vrot.lane.b32.xlu0 %v224, 96
  %v468 = vpop.permute.xlu0 %467
  %469 = vrot.lane.b32.xlu0 %v225, 96
  %v470 = vpop.permute.xlu0 %469
  %471 = vrot.lane.b32.xlu0 %v226, 96
  %v472 = vpop.permute.xlu0 %471
  %473 = vrot.lane.b32.xlu0 %v227, 96
  %v474 = vpop.permute.xlu0 %473
  %475 = vrot.lane.b32.xlu0 %v228, 96
  %v476 = vpop.permute.xlu0 %475
  %477 = vrot.lane.b32.xlu0 %v229, 96
  %v478 = vpop.permute.xlu0 %477
  %479 = vrot.lane.b32.xlu0 %v230, 96
  %v480 = vpop.permute.xlu0 %479
  %481 = vrot.lane.b32.xlu0 %v231, 96
  %v482 = vpop.permute.xlu0 %481
  %483 = vrot.lane.b32.xlu0 %v232, 96
  %v484 = vpop.permute.xlu0 %483
  %485 = vrot.lane.b32.xlu0 %v233, 96
  %v486 = vpop.permute.xlu0 %485
  %487 = vrot.lane.b32.xlu0 %v234, 96
  %v488 = vpop.permute.xlu0 %487
  %489 = vrot.lane.b32.xlu0 %v235, 96
  %v490 = vpop.permute.xlu0 %489
  %491 = vrot.lane.b32.xlu0 %v236, 96
  %v492 = vpop.permute.xlu0 %491
  %493 = vrot.lane.b32.xlu0 %v237, 96
  %v494 = vpop.permute.xlu0 %493
  %527 = vrot.lane.b32.xlu0 %v254, 32
  %v528 = vpop.permute.xlu0 %527
  %529 = vrot.lane.b32.xlu0 %v255, 32
  %v530 = vpop.permute.xlu0 %529
  %531 = vrot.lane.b32.xlu0 %v256, 32
  %v532 = vpop.permute.xlu0 %531
  %533 = vrot.lane.b32.xlu0 %v257, 32
  %v534 = vpop.permute.xlu0 %533
  %535 = vrot.lane.b32.xlu0 %v258, 32
  %v536 = vpop.permute.xlu0 %535
  %537 = vrot.lane.b32.xlu0 %v259, 32
  %v538 = vpop.permute.xlu0 %537
  %539 = vrot.lane.b32.xlu0 %v260, 32
  %v540 = vpop.permute.xlu0 %539
  %541 = vrot.lane.b32.xlu0 %v261, 32
  %v542 = vpop.permute.xlu0 %541
  %543 = vrot.lane.b32.xlu0 %v262, 32
  %v544 = vpop.permute.xlu0 %543
  %545 = vrot.lane.b32.xlu0 %v263, 32
  %v546 = vpop.permute.xlu0 %545
  %547 = vrot.lane.b32.xlu0 %v264, 32
  %v548 = vpop.permute.xlu0 %547
  %549 = vrot.lane.b32.xlu0 %v265, 32
  %v550 = vpop.permute.xlu0 %549
  %551 = vrot.lane.b32.xlu0 %v266, 32
  %v552 = vpop.permute.xlu0 %551
  %553 = vrot.lane.b32.xlu0 %v267, 32
  %v554 = vpop.permute.xlu0 %553
  %555 = vrot.lane.b32.xlu0 %v268, 32
  %v556 = vpop.permute.xlu0 %555
  %557 = vrot.lane.b32.xlu0 %v269, 32
  %v558 = vpop.permute.xlu0 %557
  %591 = vrot.lane.b32.xlu0 %v271, 64
  %v592 = vpop.permute.xlu0 %591
  %593 = vrot.lane.b32.xlu0 %v272, 64
  %v594 = vpop.permute.xlu0 %593
  %595 = vrot.lane.b32.xlu0 %v273, 64
  %v596 = vpop.permute.xlu0 %595
  %597 = vrot.lane.b32.xlu0 %v274, 64
  %v598 = vpop.permute.xlu0 %597
  %599 = vrot.lane.b32.xlu0 %v275, 64
  %v600 = vpop.permute.xlu0 %599
  %601 = vrot.lane.b32.xlu0 %v276, 64
  %v602 = vpop.permute.xlu0 %601
  %603 = vrot.lane.b32.xlu0 %v277, 64
  %v604 = vpop.permute.xlu0 %603
  %605 = vrot.lane.b32.xlu0 %v278, 64
  %v606 = vpop.permute.xlu0 %605
  %607 = vrot.lane.b32.xlu0 %v279, 64
  %v608 = vpop.permute.xlu0 %607
  %609 = vrot.lane.b32.xlu0 %v280, 64
  %v610 = vpop.permute.xlu0 %609
  %611 = vrot.lane.b32.xlu0 %v281, 64
  %v612 = vpop.permute.xlu0 %611
  %613 = vrot.lane.b32.xlu0 %v282, 64
  %v614 = vpop.permute.xlu0 %613
  %615 = vrot.lane.b32.xlu0 %v283, 64
  %v616 = vpop.permute.xlu0 %615
  %617 = vrot.lane.b32.xlu0 %v284, 64
  %v618 = vpop.permute.xlu0 %617
  %619 = vrot.lane.b32.xlu0 %v285, 64
  %v620 = vpop.permute.xlu0 %619
  %621 = vrot.lane.b32.xlu0 %v286, 64
  %v622 = vpop.permute.xlu0 %621
  %655 = vrot.lane.b32.xlu0 %v287, 96
  %v656 = vpop.permute.xlu0 %655
  %657 = vrot.lane.b32.xlu0 %v288, 96
  %v658 = vpop.permute.xlu0 %657
  %659 = vrot.lane.b32.xlu0 %v289, 96
  %v660 = vpop.permute.xlu0 %659
  %661 = vrot.lane.b32.xlu0 %v290, 96
  %v662 = vpop.permute.xlu0 %661
  %663 = vrot.lane.b32.xlu0 %v291, 96
  %v664 = vpop.permute.xlu0 %663
  %665 = vrot.lane.b32.xlu0 %v292, 96
  %v666 = vpop.permute.xlu0 %665
  %667 = vrot.lane.b32.xlu0 %v293, 96
  %v668 = vpop.permute.xlu0 %667
  %669 = vrot.lane.b32.xlu0 %v294, 96
  %v670 = vpop.permute.xlu0 %669
  %671 = vrot.lane.b32.xlu0 %v295, 96
  %v672 = vpop.permute.xlu0 %671
  %673 = vrot.lane.b32.xlu0 %v296, 96
  %v674 = vpop.permute.xlu0 %673
  %675 = vrot.lane.b32.xlu0 %v297, 96
  %v676 = vpop.permute.xlu0 %675
  %677 = vrot.lane.b32.xlu0 %v298, 96
  %v678 = vpop.permute.xlu0 %677
  %679 = vrot.lane.b32.xlu0 %v299, 96
  %v680 = vpop.permute.xlu0 %679
  %681 = vrot.lane.b32.xlu0 %v300, 96
  %v682 = vpop.permute.xlu0 %681
  %683 = vrot.lane.b32.xlu0 %v301, 96
  %v684 = vpop.permute.xlu0 %683
  %685 = vrot.lane.b32.xlu0 %v302, 96
  %v686 = vpop.permute.xlu0 %685
  %v703 = vsel %vm131, %v173, %v336
  %v704 = vsel %vm131, %v174, %v338
  %v705 = vsel %vm131, %v175, %v340
  %v706 = vsel %vm131, %v176, %v342
  %v707 = vsel %vm131, %v177, %v344
  %v708 = vsel %vm131, %v178, %v346
  %v709 = vsel %vm131, %v179, %v348
  %v710 = vsel %vm131, %v180, %v350
  %v711 = vsel %vm131, %v181, %v352
  %v712 = vsel %vm131, %v182, %v354
  %v713 = vsel %vm131, %v183, %v356
  %v714 = vsel %vm131, %v184, %v358
  %v715 = vsel %vm131, %v185, %v360
  %v716 = vsel %vm131, %v186, %v362
  %v717 = vsel %vm131, %v187, %v364
  %v718 = vsel %vm131, %v188, %v366
  %vm719 = vcmask 523264
  %v720 = vsel %vm719, %v703, %v400
  %v721 = vsel %vm719, %v704, %v402
  %v722 = vsel %vm719, %v705, %v404
  %v723 = vsel %vm719, %v706, %v406
  %v724 = vsel %vm719, %v707, %v408
  %v725 = vsel %vm719, %v708, %v410
  %v726 = vsel %vm719, %v709, %v412
  %v727 = vsel %vm719, %v710, %v414
  %v728 = vsel %vm719, %v711, %v416
  %v729 = vsel %vm719, %v712, %v418
  %v730 = vsel %vm719, %v713, %v420
  %v731 = vsel %vm719, %v714, %v422
  %v732 = vsel %vm719, %v715, %v424
  %v733 = vsel %vm719, %v716, %v426
  %v734 = vsel %vm719, %v717, %v428
  %v735 = vsel %vm719, %v718, %v430
  %vm736 = vcmask 785408
  %v737 = vsel %vm736, %v720, %v464
  %v738 = vsel %vm736, %v721, %v466
  %v739 = vsel %vm736, %v722, %v468
  %v740 = vsel %vm736, %v723, %v470
  %v741 = vsel %vm736, %v724, %v472
  %v742 = vsel %vm736, %v725, %v474
  %v743 = vsel %vm736, %v726, %v476
  %v744 = vsel %vm736, %v727, %v478
  %v745 = vsel %vm736, %v728, %v480
  %v746 = vsel %vm736, %v729, %v482
  %v747 = vsel %vm736, %v730, %v484
  %v748 = vsel %vm736, %v731, %v486
  %v749 = vsel %vm736, %v732, %v488
  %v750 = vsel %vm736, %v733, %v490
  %v751 = vsel %vm736, %v734, %v492
  %v752 = vsel %vm736, %v735, %v494
  %v753 = vsel %vm131, %v238, %v528
  %v754 = vsel %vm131, %v239, %v530
  %v755 = vsel %vm131, %v240, %v532
  %v756 = vsel %vm131, %v241, %v534
  %v757 = vsel %vm131, %v242, %v536
  %v758 = vsel %vm131, %v243, %v538
  %v759 = vsel %vm131, %v244, %v540
  %v760 = vsel %vm131, %v245, %v542
  %v761 = vsel %vm131, %v246, %v544
  %v762 = vsel %vm131, %v247, %v546
  %v763 = vsel %vm131, %v248, %v548
  %v764 = vsel %vm131, %v249, %v550
  %v765 = vsel %vm131, %v250, %v552
  %v766 = vsel %vm131, %v251, %v554
  %v767 = vsel %vm131, %v252, %v556
  %v768 = vsel %vm131, %v253, %v558
  %v769 = vsel %vm719, %v753, %v592
  %v770 = vsel %vm719, %v754, %v594
  %v771 = vsel %vm719, %v755, %v596
  %v772 = vsel %vm719, %v756, %v598
  %v773 = vsel %vm719, %v757, %v600
  %v774 = vsel %vm719, %v758, %v602
  %v775 = vsel %vm719, %v759, %v604
  %v776 = vsel %vm719, %v760, %v606
  %v777 = vsel %vm719, %v761, %v608
  %v778 = vsel %vm719, %v762, %v610
  %v779 = vsel %vm719, %v763, %v612
  %v780 = vsel %vm719, %v764, %v614
  %v781 = vsel %vm719, %v765, %v616
  %v782 = vsel %vm719, %v766, %v618
  %v783 = vsel %vm719, %v767, %v620
  %v784 = vsel %vm719, %v768, %v622
  %v785 = vsel %vm736, %v769, %v656
  %v786 = vsel %vm736, %v770, %v658
  %v787 = vsel %vm736, %v771, %v660
  %v788 = vsel %vm736, %v772, %v662
  %v789 = vsel %vm736, %v773, %v664
  %v790 = vsel %vm736, %v774, %v666
  %v791 = vsel %vm736, %v775, %v668
  %v792 = vsel %vm736, %v776, %v670
  %v793 = vsel %vm736, %v777, %v672
  %v794 = vsel %vm736, %v778, %v674
  %v795 = vsel %vm736, %v779, %v676
  %v796 = vsel %vm736, %v780, %v678
  %v797 = vsel %vm736, %v781, %v680
  %v798 = vsel %vm736, %v782, %v682
  %v799 = vsel %vm736, %v783, %v684
  %v800 = vsel %vm736, %v784, %v686
  %v801 = vld [vmem:[%s1] sm:$0xff]
  %v802 = vld [vmem:[%s1 + $0x8] sm:$0xff]
  %v803 = vld [vmem:[%s1 + $0x10] sm:$0xff]
  %v804 = vld [vmem:[%s1 + $0x18] sm:$0xff]
  %v805 = vld [vmem:[%s1 + $0x20] sm:$0xff]
  %v806 = vld [vmem:[%s1 + $0x28] sm:$0xff]
  %v807 = vld [vmem:[%s1 + $0x30] sm:$0xff]
  %v808 = vld [vmem:[%s1 + $0x38] sm:$0xff]
  %v809 = vld [vmem:[%s1 + $0x40] sm:$0xff]
  %v810 = vld [vmem:[%s1 + $0x48] sm:$0xff]
  %v811 = vld [vmem:[%s1 + $0x50] sm:$0xff]
  %v812 = vld [vmem:[%s1 + $0x58] sm:$0xff]
  %v813 = vld [vmem:[%s1 + $0x60] sm:$0xff]
  %v814 = vld [vmem:[%s1 + $0x68] sm:$0xff]
  %v815 = vld [vmem:[%s1 + $0x70] sm:$0xff]
  %v816 = vld [vmem:[%s1 + $0x78] sm:$0xff]
  %v817 = vld [vmem:[%s1 + $0x80] sm:$0xff]
  %v818 = vld [vmem:[%s1 + $0x88] sm:$0xff]
  %v819 = vld [vmem:[%s1 + $0x90] sm:$0xff]
  %v820 = vld [vmem:[%s1 + $0x98] sm:$0xff]
  %v821 = vld [vmem:[%s1 + $0xa0] sm:$0xff]
  %v822 = vld [vmem:[%s1 + $0xa8] sm:$0xff]
  %v823 = vld [vmem:[%s1 + $0xb0] sm:$0xff]
  %v824 = vld [vmem:[%s1 + $0xb8] sm:$0xff]
  %v825 = vld [vmem:[%s1 + $0xc0] sm:$0xff]
  %v826 = vld [vmem:[%s1 + $0xc8] sm:$0xff]
  %v827 = vld [vmem:[%s1 + $0xd0] sm:$0xff]
  %v828 = vld [vmem:[%s1 + $0xd8] sm:$0xff]
  %v829 = vld [vmem:[%s1 + $0xe0] sm:$0xff]
  %v830 = vld [vmem:[%s1 + $0xe8] sm:$0xff]
  %v831 = vld [vmem:[%s1 + $0xf0] sm:$0xff]
  %v832 = vld [vmem:[%s1 + $0xf8] sm:$0xff]
  %v833 = vld [vmem:[%s1 + $0x100] sm:$0xff]
  %v834 = vld [vmem:[%s1 + $0x108] sm:$0xff]
  %v835 = vld [vmem:[%s1 + $0x110] sm:$0xff]
  %v836 = vld [vmem:[%s1 + $0x118] sm:$0xff]
  %v837 = vld [vmem:[%s2] sm:$0x1]
  %v839 = vperm.slane %v837, 0
  %v842 = vsel %vm131, %v303, 0
  %v845 = vsel %vm131, %v304, 0
  %v848 = vsel %vm131, %v305, 0
  %v851 = vsel %vm131, %v306, 0
  %v854 = vsel %vm131, %v307, 0
  %v857 = vsel %vm131, %v308, 0
  %v860 = vsel %vm131, %v309, 0
  %v863 = vsel %vm131, %v310, 0
  %v866 = vsel %vm131, %v311, 0
  %v869 = vsel %vm131, %v312, 0
  %v872 = vsel %vm131, %v313, 0
  %v875 = vsel %vm131, %v314, 0
  %v878 = vsel %vm131, %v315, 0
  %v881 = vsel %vm131, %v316, 0
  %v884 = vsel %vm131, %v317, 0
  %v887 = vsel %vm131, %v318, 0
  %889 = vmatpush.msra.mxu0 %v816
  %890 = vmatpush.msra.mxu0 %v815
  %891 = vmatpush.msra.mxu0 %v814
  %892 = vmatpush.msra.mxu0 %v813
  %893 = vmatpush.msra.mxu0 %v812
  %894 = vmatpush.msra.mxu0 %v811
  %895 = vmatpush.msra.mxu0 %v810
  %896 = vmatpush.msra.mxu0 %v809
  %897 = vmatpush.msra.mxu0 %v808
  %898 = vmatpush.msra.mxu0 %v807
  %899 = vmatpush.msra.mxu0 %v806
  %900 = vmatpush.msra.mxu0 %v805
  %901 = vmatpush.msra.mxu0 %v804
  %902 = vmatpush.msra.mxu0 %v803
  %903 = vmatpush.msra.mxu0 %v802
  %904 = vmatpush.msra.mxu0 %v801
  %905 = vmatmul.f32.gmra.mxu0 %v737
  %v906 = vpop.f32.mrf.mxu0
  %v907 = vadd.f32 %v839, %v906
  %908 = vmatmul.f32.gmra.mxu0 %v738
  %v909 = vpop.f32.mrf.mxu0
  %v910 = vadd.f32 %v839, %v909
  %911 = vmatmul.f32.gmra.mxu0 %v739
  %v912 = vpop.f32.mrf.mxu0
  %v913 = vadd.f32 %v839, %v912
  %914 = vmatmul.f32.gmra.mxu0 %v740
  %v915 = vpop.f32.mrf.mxu0
  %v916 = vadd.f32 %v839, %v915
  %917 = vmatmul.f32.gmra.mxu0 %v741
  %v918 = vpop.f32.mrf.mxu0
  %v919 = vadd.f32 %v839, %v918
  %920 = vmatmul.f32.gmra.mxu0 %v742
  %v921 = vpop.f32.mrf.mxu0
  %v922 = vadd.f32 %v839, %v921
  %923 = vmatmul.f32.gmra.mxu0 %v743
  %v924 = vpop.f32.mrf.mxu0
  %v925 = vadd.f32 %v839, %v924
  %926 = vmatmul.f32.gmra.mxu0 %v744
  %v927 = vpop.f32.mrf.mxu0
  %v928 = vadd.f32 %v839, %v927
  %929 = vmatmul.f32.gmra.mxu0 %v745
  %v930 = vpop.f32.mrf.mxu0
  %v931 = vadd.f32 %v839, %v930
  %932 = vmatmul.f32.gmra.mxu0 %v746
  %v933 = vpop.f32.mrf.mxu0
  %v934 = vadd.f32 %v839, %v933
  %935 = vmatmul.f32.gmra.mxu0 %v747
  %v936 = vpop.f32.mrf.mxu0
  %v937 = vadd.f32 %v839, %v936
  %938 = vmatmul.f32.gmra.mxu0 %v748
  %v939 = vpop.f32.mrf.mxu0
  %v940 = vadd.f32 %v839, %v939
  %941 = vmatmul.f32.gmra.mxu0 %v749
  %v942 = vpop.f32.mrf.mxu0
  %v943 = vadd.f32 %v839, %v942
  %944 = vmatmul.f32.gmra.mxu0 %v750
  %v945 = vpop.f32.mrf.mxu0
  %v946 = vadd.f32 %v839, %v945
  %947 = vmatmul.f32.gmra.mxu0 %v751
  %v948 = vpop.f32.mrf.mxu0
  %v949 = vadd.f32 %v839, %v948
  %950 = vmatmul.f32.gmra.mxu0 %v752
  %v951 = vpop.f32.mrf.mxu0
  %v952 = vadd.f32 %v839, %v951
  %953 = vdwg.mxu0
  %954 = vmatpush.msra.mxu0 %v832
  %955 = vmatpush.msra.mxu0 %v831
  %956 = vmatpush.msra.mxu0 %v830
  %957 = vmatpush.msra.mxu0 %v829
  %958 = vmatpush.msra.mxu0 %v828
  %959 = vmatpush.msra.mxu0 %v827
  %960 = vmatpush.msra.mxu0 %v826
  %961 = vmatpush.msra.mxu0 %v825
  %962 = vmatpush.msra.mxu0 %v824
  %963 = vmatpush.msra.mxu0 %v823
  %964 = vmatpush.msra.mxu0 %v822
  %965 = vmatpush.msra.mxu0 %v821
  %966 = vmatpush.msra.mxu0 %v820
  %967 = vmatpush.msra.mxu0 %v819
  %968 = vmatpush.msra.mxu0 %v818
  %969 = vmatpush.msra.mxu0 %v817
  %970 = vmatmul.f32.gmra.mxu0 %v785
  %v971 = vpop.f32.mrf.mxu0
  %v972 = vadd.f32 %v907, %v971
  %973 = vmatmul.f32.gmra.mxu0 %v786
  %v974 = vpop.f32.mrf.mxu0
  %v975 = vadd.f32 %v910, %v974
  %976 = vmatmul.f32.gmra.mxu0 %v787
  %v977 = vpop.f32.mrf.mxu0
  %v978 = vadd.f32 %v913, %v977
  %979 = vmatmul.f32.gmra.mxu0 %v788
  %v980 = vpop.f32.mrf.mxu0
  %v981 = vadd.f32 %v916, %v980
  %982 = vmatmul.f32.gmra.mxu0 %v789
  %v983 = vpop.f32.mrf.mxu0
  %v984 = vadd.f32 %v919, %v983
  %985 = vmatmul.f32.gmra.mxu0 %v790
  %v986 = vpop.f32.mrf.mxu0
  %v987 = vadd.f32 %v922, %v986
  %988 = vmatmul.f32.gmra.mxu0 %v791
  %v989 = vpop.f32.mrf.mxu0
  %v990 = vadd.f32 %v925, %v989
  %991 = vmatmul.f32.gmra.mxu0 %v792
  %v992 = vpop.f32.mrf.mxu0
  %v993 = vadd.f32 %v928, %v992
  %994 = vmatmul.f32.gmra.mxu0 %v793
  %v995 = vpop.f32.mrf.mxu0
  %v996 = vadd.f32 %v931, %v995
  %997 = vmatmul.f32.gmra.mxu0 %v794
  %v998 = vpop.f32.mrf.mxu0
  %v999 = vadd.f32 %v934, %v998
  %1000 = vmatmul.f32.gmra.mxu0 %v795
  %v1001 = vpop.f32.mrf.mxu0
  %v1002 = vadd.f32 %v937, %v1001
  %1003 = vmatmul.f32.gmra.mxu0 %v796
  %v1004 = vpop.f32.mrf.mxu0
  %v1005 = vadd.f32 %v940, %v1004
  %1006 = vmatmul.f32.gmra.mxu0 %v797
  %v1007 = vpop.f32.mrf.mxu0
  %v1008 = vadd.f32 %v943, %v1007
  %1009 = vmatmul.f32.gmra.mxu0 %v798
  %v1010 = vpop.f32.mrf.mxu0
  %v1011 = vadd.f32 %v946, %v1010
  %1012 = vmatmul.f32.gmra.mxu0 %v799
  %v1013 = vpop.f32.mrf.mxu0
  %v1014 = vadd.f32 %v949, %v1013
  %1015 = vmatmul.f32.gmra.mxu0 %v800
  %v1016 = vpop.f32.mrf.mxu0
  %v1017 = vadd.f32 %v952, %v1016
  %1018 = vdwg.mxu0
  %1019 = vmatpush.msra.mxu0 0.0
  %1020 = vmatpush.msra.mxu0 0.0
  %1021 = vmatpush.msra.mxu0 0.0
  %1022 = vmatpush.msra.mxu0 0.0
  %1023 = vmatpush.msra.mxu0 0.0
  %1024 = vmatpush.msra.mxu0 0.0
  %1025 = vmatpush.msra.mxu0 0.0
  %1026 = vmatpush.msra.mxu0 0.0
  %1027 = vmatpush.msra.mxu0 0.0
  %1028 = vmatpush.msra.mxu0 0.0
  %1029 = vmatpush.msra.mxu0 0.0
  %1030 = vmatpush.msra.mxu0 0.0
  %1031 = vmatpush.msra.mxu0 %v836
  %1032 = vmatpush.msra.mxu0 %v835
  %1033 = vmatpush.msra.mxu0 %v834
  %1034 = vmatpush.msra.mxu0 %v833
  %1035 = vmatmul.f32.gmra.mxu0 %v842
  %v1036 = vpop.f32.mrf.mxu0
  %v1037 = vadd.f32 %v972, %v1036
  %1038 = vmatmul.f32.gmra.mxu0 %v845
  %v1039 = vpop.f32.mrf.mxu0
  %v1040 = vadd.f32 %v975, %v1039
  %1041 = vmatmul.f32.gmra.mxu0 %v848
  %v1042 = vpop.f32.mrf.mxu0
  %v1043 = vadd.f32 %v978, %v1042
  %1044 = vmatmul.f32.gmra.mxu0 %v851
  %v1045 = vpop.f32.mrf.mxu0
  %v1046 = vadd.f32 %v981, %v1045
  %1047 = vmatmul.f32.gmra.mxu0 %v854
  %v1048 = vpop.f32.mrf.mxu0
  %v1049 = vadd.f32 %v984, %v1048
  %1050 = vmatmul.f32.gmra.mxu0 %v857
  %v1051 = vpop.f32.mrf.mxu0
  %v1052 = vadd.f32 %v987, %v1051
  %1053 = vmatmul.f32.gmra.mxu0 %v860
  %v1054 = vpop.f32.mrf.mxu0
  %v1055 = vadd.f32 %v990, %v1054
  %1056 = vmatmul.f32.gmra.mxu0 %v863
  %v1057 = vpop.f32.mrf.mxu0
  %v1058 = vadd.f32 %v993, %v1057
  %1059 = vmatmul.f32.gmra.mxu0 %v866
  %v1060 = vpop.f32.mrf.mxu0
  %v1061 = vadd.f32 %v996, %v1060
  %1062 = vmatmul.f32.gmra.mxu0 %v869
  %v1063 = vpop.f32.mrf.mxu0
  %v1064 = vadd.f32 %v999, %v1063
  %1065 = vmatmul.f32.gmra.mxu0 %v872
  %v1066 = vpop.f32.mrf.mxu0
  %v1067 = vadd.f32 %v1002, %v1066
  %1068 = vmatmul.f32.gmra.mxu0 %v875
  %v1069 = vpop.f32.mrf.mxu0
  %v1070 = vadd.f32 %v1005, %v1069
  %1071 = vmatmul.f32.gmra.mxu0 %v878
  %v1072 = vpop.f32.mrf.mxu0
  %v1073 = vadd.f32 %v1008, %v1072
  %1074 = vmatmul.f32.gmra.mxu0 %v881
  %v1075 = vpop.f32.mrf.mxu0
  %v1076 = vadd.f32 %v1011, %v1075
  %1077 = vmatmul.f32.gmra.mxu0 %v884
  %v1078 = vpop.f32.mrf.mxu0
  %v1079 = vadd.f32 %v1014, %v1078
  %1080 = vmatmul.f32.gmra.mxu0 %v887
  %v1081 = vpop.f32.mrf.mxu0
  %v1082 = vadd.f32 %v1017, %v1081
  %1083 = vdwg.mxu0
  %v1084 = vmax.f32 %v1037, 0.0
  %v1085 = vmax.f32 %v1040, 0.0
  %v1086 = vmax.f32 %v1043, 0.0
  %v1087 = vmax.f32 %v1046, 0.0
  %v1088 = vmax.f32 %v1049, 0.0
  %v1089 = vmax.f32 %v1052, 0.0
  %v1090 = vmax.f32 %v1055, 0.0
  %v1091 = vmax.f32 %v1058, 0.0
  %v1092 = vmax.f32 %v1061, 0.0
  %v1093 = vmax.f32 %v1064, 0.0
  %v1094 = vmax.f32 %v1067, 0.0
  %v1095 = vmax.f32 %v1070, 0.0
  %v1096 = vmax.f32 %v1073, 0.0
  %v1097 = vmax.f32 %v1076, 0.0
  %v1098 = vmax.f32 %v1079, 0.0
  %v1099 = vmax.f32 %v1082, 0.0
  %v1116 = vrot.slane %v1084, 7
  %v1117 = vrot.slane %v1085, 7
  %v1118 = vrot.slane %v1086, 7
  %v1119 = vrot.slane %v1087, 7
  %v1120 = vrot.slane %v1088, 7
  %v1121 = vrot.slane %v1089, 7
  %v1122 = vrot.slane %v1090, 7
  %v1123 = vrot.slane %v1091, 7
  %v1124 = vrot.slane %v1092, 7
  %v1125 = vrot.slane %v1093, 7
  %v1126 = vrot.slane %v1094, 7
  %v1127 = vrot.slane %v1095, 7
  %v1128 = vrot.slane %v1096, 7
  %v1129 = vrot.slane %v1097, 7
  %v1130 = vrot.slane %v1098, 7
  %v1131 = vrot.slane %v1099, 7
  %v1148 = vsel %vm98, 0.0, %v1116
  %v1149 = vsel %vm98, 0.0, %v1117
  %v1150 = vsel %vm98, 0.0, %v1118
  %v1151 = vsel %vm98, 0.0, %v1119
  %v1152 = vsel %vm98, 0.0, %v1120
  %v1153 = vsel %vm98, 0.0, %v1121
  %v1154 = vsel %vm98, 0.0, %v1122
  %v1155 = vsel %vm98, 0.0, %v1123
  %v1156 = vsel %vm98, 0.0, %v1124
  %v1157 = vsel %vm98, 0.0, %v1125
  %v1158 = vsel %vm98, 0.0, %v1126
  %v1159 = vsel %vm98, 0.0, %v1127
  %v1160 = vsel %vm98, 0.0, %v1128
  %v1161 = vsel %vm98, 0.0, %v1129
  %v1162 = vsel %vm98, 0.0, %v1130
  %v1163 = vsel %vm98, 0.0, %v1131
  %v1164 = vsel %vm98, %v1116, 0.0
  %v1165 = vsel %vm98, %v1117, 0.0
  %v1166 = vsel %vm98, %v1118, 0.0
  %v1167 = vsel %vm98, %v1119, 0.0
  %v1168 = vsel %vm98, %v1120, 0.0
  %v1169 = vsel %vm98, %v1121, 0.0
  %v1170 = vsel %vm98, %v1122, 0.0
  %v1171 = vsel %vm98, %v1123, 0.0
  %v1172 = vsel %vm98, %v1124, 0.0
  %v1173 = vsel %vm98, %v1125, 0.0
  %v1174 = vsel %vm98, %v1126, 0.0
  %v1175 = vsel %vm98, %v1127, 0.0
  %v1176 = vsel %vm98, %v1128, 0.0
  %v1177 = vsel %vm98, %v1129, 0.0
  %v1178 = vsel %vm98, %v1130, 0.0
  %v1179 = vsel %vm98, %v1131, 0.0
  %1180 = vst.msk [vmem:[#allocation3] sm:$0xff] %vm131, 0.0
  %1181 = vst.msk [vmem:[#allocation3 + $0x8] sm:$0x3] %vm133, 0.0
  %1182 = vst.msk [vmem:[#allocation3 + $0x10] sm:$0xff] %vm131, %v1148
  %1183 = vst.msk [vmem:[#allocation3 + $0x18] sm:$0x3] %vm133, %v1164
  %1184 = vst.msk [vmem:[#allocation3 + $0x20] sm:$0xff] %vm131, %v1149
  %1185 = vst.msk [vmem:[#allocation3 + $0x28] sm:$0x3] %vm133, %v1165
  %1186 = vst.msk [vmem:[#allocation3 + $0x30] sm:$0xff] %vm131, %v1150
  %1187 = vst.msk [vmem:[#allocation3 + $0x38] sm:$0x3] %vm133, %v1166
  %1188 = vst.msk [vmem:[#allocation3 + $0x40] sm:$0xff] %vm131, %v1151
  %1189 = vst.msk [vmem:[#allocation3 + $0x48] sm:$0x3] %vm133, %v1167
  %1190 = vst.msk [vmem:[#allocation3 + $0x50] sm:$0xff] %vm131, %v1152
  %1191 = vst.msk [vmem:[#allocation3 + $0x58] sm:$0x3] %vm133, %v1168
  %1192 = vst.msk [vmem:[#allocation3 + $0x60] sm:$0xff] %vm131, %v1153
  %1193 = vst.msk [vmem:[#allocation3 + $0x68] sm:$0x3] %vm133, %v1169
  %1194 = vst.msk [vmem:[#allocation3 + $0x70] sm:$0xff] %vm131, %v1154
  %1195 = vst.msk [vmem:[#allocation3 + $0x78] sm:$0x3] %vm133, %v1170
  %1196 = vst.msk [vmem:[#allocation3 + $0x80] sm:$0xff] %vm131, %v1155
  %1197 = vst.msk [vmem:[#allocation3 + $0x88] sm:$0x3] %vm133, %v1171
  %1198 = vst.msk [vmem:[#allocation3 + $0x90] sm:$0xff] %vm131, 0.0
  %1199 = vst.msk [vmem:[#allocation3 + $0x98] sm:$0x3] %vm133, 0.0
  %1200 = vst.msk [vmem:[#allocation3 + $0xa0] sm:$0xff] %vm131, 0.0
  %1201 = vst.msk [vmem:[#allocation3 + $0xa8] sm:$0x3] %vm133, 0.0
  %1202 = vst.msk [vmem:[#allocation3 + $0xb0] sm:$0xff] %vm131, %v1156
  %1203 = vst.msk [vmem:[#allocation3 + $0xb8] sm:$0x3] %vm133, %v1172
  %1204 = vst.msk [vmem:[#allocation3 + $0xc0] sm:$0xff] %vm131, %v1157
  %1205 = vst.msk [vmem:[#allocation3 + $0xc8] sm:$0x3] %vm133, %v1173
  %1206 = vst.msk [vmem:[#allocation3 + $0xd0] sm:$0xff] %vm131, %v1158
  %1207 = vst.msk [vmem:[#allocation3 + $0xd8] sm:$0x3] %vm133, %v1174
  %1208 = vst.msk [vmem:[#allocation3 + $0xe0] sm:$0xff] %vm131, %v1159
  %1209 = vst.msk [vmem:[#allocation3 + $0xe8] sm:$0x3] %vm133, %v1175
  %1210 = vst.msk [vmem:[#allocation3 + $0xf0] sm:$0xff] %vm131, %v1160
  %1211 = vst.msk [vmem:[#allocation3 + $0xf8] sm:$0x3] %vm133, %v1176
  %1212 = vst.msk [vmem:[#allocation3 + $0x100] sm:$0xff] %vm131, %v1161
  %1213 = vst.msk [vmem:[#allocation3 + $0x108] sm:$0x3] %vm133, %v1177
  %1214 = vst.msk [vmem:[#allocation3 + $0x110] sm:$0xff] %vm131, %v1162
  %1215 = vst.msk [vmem:[#allocation3 + $0x118] sm:$0x3] %vm133, %v1178
  %1216 = vst.msk [vmem:[#allocation3 + $0x120] sm:$0xff] %vm131, %v1163
  %1217 = vst.msk [vmem:[#allocation3 + $0x128] sm:$0x3] %vm133, %v1179
  %1218 = vst.msk [vmem:[#allocation3 + $0x130] sm:$0xff] %vm131, 0.0
  %1219 = vst.msk [vmem:[#allocation3 + $0x138] sm:$0x3] %vm133, 0.0
  %v1220 = vld [vmem:[#allocation3] sm:$0xff]
  %v1221 = vld [vmem:[#allocation3 + $0x10] sm:$0xff]
  %v1222 = vld [vmem:[#allocation3 + $0x20] sm:$0xff]
  %v1223 = vld [vmem:[#allocation3 + $0x30] sm:$0xff]
  %v1224 = vld [vmem:[#allocation3 + $0x40] sm:$0xff]
  %v1225 = vld [vmem:[#allocation3 + $0x50] sm:$0xff]
  %v1226 = vld [vmem:[#allocation3 + $0x60] sm:$0xff]
  %v1227 = vld [vmem:[#allocation3 + $0x70] sm:$0xff]
  %v1228 = vld [vmem:[#allocation3 + $0xa0] sm:$0xff]
  %v1229 = vld [vmem:[#allocation3 + $0xb0] sm:$0xff]
  %v1230 = vld [vmem:[#allocation3 + $0xc0] sm:$0xff]
  %v1231 = vld [vmem:[#allocation3 + $0xd0] sm:$0xff]
  %v1232 = vld [vmem:[#allocation3 + $0xe0] sm:$0xff]
  %v1233 = vld [vmem:[#allocation3 + $0xf0] sm:$0xff]
  %v1234 = vld [vmem:[#allocation3 + $0x100] sm:$0xff]
  %v1235 = vld [vmem:[#allocation3 + $0x110] sm:$0xff]
  %v1236 = vld [vmem:[#allocation3 + $0x1] sm:$0xff]
  %v1237 = vld [vmem:[#allocation3 + $0x11] sm:$0xff]
  %v1238 = vld [vmem:[#allocation3 + $0x21] sm:$0xff]
  %v1239 = vld [vmem:[#allocation3 + $0x31] sm:$0xff]
  %v1240 = vld [vmem:[#allocation3 + $0x41] sm:$0xff]
  %v1241 = vld [vmem:[#allocation3 + $0x51] sm:$0xff]
  %v1242 = vld [vmem:[#allocation3 + $0x61] sm:$0xff]
  %v1243 = vld [vmem:[#allocation3 + $0x71] sm:$0xff]
  %v1244 = vld [vmem:[#allocation3 + $0xa1] sm:$0xff]
  %v1245 = vld [vmem:[#allocation3 + $0xb1] sm:$0xff]
  %v1246 = vld [vmem:[#allocation3 + $0xc1] sm:$0xff]
  %v1247 = vld [vmem:[#allocation3 + $0xd1] sm:$0xff]
  %v1248 = vld [vmem:[#allocation3 + $0xe1] sm:$0xff]
  %v1249 = vld [vmem:[#allocation3 + $0xf1] sm:$0xff]
  %v1250 = vld [vmem:[#allocation3 + $0x101] sm:$0xff]
  %v1251 = vld [vmem:[#allocation3 + $0x111] sm:$0xff]
  %v1252 = vld [vmem:[#allocation3 + $0x2] sm:$0xff]
  %v1253 = vld [vmem:[#allocation3 + $0x12] sm:$0xff]
  %v1254 = vld [vmem:[#allocation3 + $0x22] sm:$0xff]
  %v1255 = vld [vmem:[#allocation3 + $0x32] sm:$0xff]
  %v1256 = vld [vmem:[#allocation3 + $0x42] sm:$0xff]
  %v1257 = vld [vmem:[#allocation3 + $0x52] sm:$0xff]
  %v1258 = vld [vmem:[#allocation3 + $0x62] sm:$0xff]
  %v1259 = vld [vmem:[#allocation3 + $0x72] sm:$0xff]
  %v1260 = vld [vmem:[#allocation3 + $0xa2] sm:$0xff]
  %v1261 = vld [vmem:[#allocation3 + $0xb2] sm:$0xff]
  %v1262 = vld [vmem:[#allocation3 + $0xc2] sm:$0xff]
  %v1263 = vld [vmem:[#allocation3 + $0xd2] sm:$0xff]
  %v1264 = vld [vmem:[#allocation3 + $0xe2] sm:$0xff]
  %v1265 = vld [vmem:[#allocation3 + $0xf2] sm:$0xff]
  %v1266 = vld [vmem:[#allocation3 + $0x102] sm:$0xff]
  %v1267 = vld [vmem:[#allocation3 + $0x112] sm:$0xff]
  %s1268 = scalar_lea.vmem [#allocation3], 16
  %v1269 = vld [vmem:[%s1268] sm:$0xff]
  %v1270 = vld [vmem:[%s1268 + $0x10] sm:$0xff]
  %v1271 = vld [vmem:[%s1268 + $0x20] sm:$0xff]
  %v1272 = vld [vmem:[%s1268 + $0x30] sm:$0xff]
  %v1273 = vld [vmem:[%s1268 + $0x40] sm:$0xff]
  %v1274 = vld [vmem:[%s1268 + $0x50] sm:$0xff]
  %v1275 = vld [vmem:[%s1268 + $0x60] sm:$0xff]
  %v1276 = vld [vmem:[%s1268 + $0x70] sm:$0xff]
  %v1277 = vld [vmem:[%s1268 + $0xa0] sm:$0xff]
  %v1278 = vld [vmem:[%s1268 + $0xb0] sm:$0xff]
  %v1279 = vld [vmem:[%s1268 + $0xc0] sm:$0xff]
  %v1280 = vld [vmem:[%s1268 + $0xd0] sm:$0xff]
  %v1281 = vld [vmem:[%s1268 + $0xe0] sm:$0xff]
  %v1282 = vld [vmem:[%s1268 + $0xf0] sm:$0xff]
  %v1283 = vld [vmem:[%s1268 + $0x100] sm:$0xff]
  %v1284 = vld [vmem:[%s1268 + $0x110] sm:$0xff]
  %v1285 = vld [vmem:[%s1268 + $0x1] sm:$0xff]
  %v1286 = vld [vmem:[%s1268 + $0x11] sm:$0xff]
  %v1287 = vld [vmem:[%s1268 + $0x21] sm:$0xff]
  %v1288 = vld [vmem:[%s1268 + $0x31] sm:$0xff]
  %v1289 = vld [vmem:[%s1268 + $0x41] sm:$0xff]
  %v1290 = vld [vmem:[%s1268 + $0x51] sm:$0xff]
  %v1291 = vld [vmem:[%s1268 + $0x61] sm:$0xff]
  %v1292 = vld [vmem:[%s1268 + $0x71] sm:$0xff]
  %v1293 = vld [vmem:[%s1268 + $0xa1] sm:$0xff]
  %v1294 = vld [vmem:[%s1268 + $0xb1] sm:$0xff]
  %v1295 = vld [vmem:[%s1268 + $0xc1] sm:$0xff]
  %v1296 = vld [vmem:[%s1268 + $0xd1] sm:$0xff]
  %v1297 = vld [vmem:[%s1268 + $0xe1] sm:$0xff]
  %v1298 = vld [vmem:[%s1268 + $0xf1] sm:$0xff]
  %v1299 = vld [vmem:[%s1268 + $0x101] sm:$0xff]
  %v1300 = vld [vmem:[%s1268 + $0x111] sm:$0xff]
  %v1301 = vld [vmem:[%s1268 + $0x2] sm:$0xff]
  %v1302 = vld [vmem:[%s1268 + $0x12] sm:$0xff]
  %v1303 = vld [vmem:[%s1268 + $0x22] sm:$0xff]
  %v1304 = vld [vmem:[%s1268 + $0x32] sm:$0xff]
  %v1305 = vld [vmem:[%s1268 + $0x42] sm:$0xff]
  %v1306 = vld [vmem:[%s1268 + $0x52] sm:$0xff]
  %v1307 = vld [vmem:[%s1268 + $0x62] sm:$0xff]
  %v1308 = vld [vmem:[%s1268 + $0x72] sm:$0xff]
  %v1309 = vld [vmem:[%s1268 + $0xa2] sm:$0xff]
  %v1310 = vld [vmem:[%s1268 + $0xb2] sm:$0xff]
  %v1311 = vld [vmem:[%s1268 + $0xc2] sm:$0xff]
  %v1312 = vld [vmem:[%s1268 + $0xd2] sm:$0xff]
  %v1313 = vld [vmem:[%s1268 + $0xe2] sm:$0xff]
  %v1314 = vld [vmem:[%s1268 + $0xf2] sm:$0xff]
  %v1315 = vld [vmem:[%s1268 + $0x102] sm:$0xff]
  %v1316 = vld [vmem:[%s1268 + $0x112] sm:$0xff]
  %s1317 = scalar_lea.vmem [#allocation3], 32
  %v1318 = vld [vmem:[%s1317] sm:$0xff]
  %v1319 = vld [vmem:[%s1317 + $0x10] sm:$0xff]
  %v1320 = vld [vmem:[%s1317 + $0x20] sm:$0xff]
  %v1321 = vld [vmem:[%s1317 + $0x30] sm:$0xff]
  %v1322 = vld [vmem:[%s1317 + $0x40] sm:$0xff]
  %v1323 = vld [vmem:[%s1317 + $0x50] sm:$0xff]
  %v1324 = vld [vmem:[%s1317 + $0x60] sm:$0xff]
  %v1325 = vld [vmem:[%s1317 + $0x70] sm:$0xff]
  %v1326 = vld [vmem:[%s1317 + $0xa0] sm:$0xff]
  %v1327 = vld [vmem:[%s1317 + $0xb0] sm:$0xff]
  %v1328 = vld [vmem:[%s1317 + $0xc0] sm:$0xff]
  %v1329 = vld [vmem:[%s1317 + $0xd0] sm:$0xff]
  %v1330 = vld [vmem:[%s1317 + $0xe0] sm:$0xff]
  %v1331 = vld [vmem:[%s1317 + $0xf0] sm:$0xff]
  %v1332 = vld [vmem:[%s1317 + $0x100] sm:$0xff]
  %v1333 = vld [vmem:[%s1317 + $0x110] sm:$0xff]
  %v1334 = vld [vmem:[%s1317 + $0x1] sm:$0xff]
  %v1335 = vld [vmem:[%s1317 + $0x11] sm:$0xff]
  %v1336 = vld [vmem:[%s1317 + $0x21] sm:$0xff]
  %v1337 = vld [vmem:[%s1317 + $0x31] sm:$0xff]
  %v1338 = vld [vmem:[%s1317 + $0x41] sm:$0xff]
  %v1339 = vld [vmem:[%s1317 + $0x51] sm:$0xff]
  %v1340 = vld [vmem:[%s1317 + $0x61] sm:$0xff]
  %v1341 = vld [vmem:[%s1317 + $0x71] sm:$0xff]
  %v1342 = vld [vmem:[%s1317 + $0xa1] sm:$0xff]
  %v1343 = vld [vmem:[%s1317 + $0xb1] sm:$0xff]
  %v1344 = vld [vmem:[%s1317 + $0xc1] sm:$0xff]
  %v1345 = vld [vmem:[%s1317 + $0xd1] sm:$0xff]
  %v1346 = vld [vmem:[%s1317 + $0xe1] sm:$0xff]
  %v1347 = vld [vmem:[%s1317 + $0xf1] sm:$0xff]
  %v1348 = vld [vmem:[%s1317 + $0x101] sm:$0xff]
  %v1349 = vld [vmem:[%s1317 + $0x111] sm:$0xff]
  %v1350 = vld [vmem:[%s1317 + $0x2] sm:$0xff]
  %v1351 = vld [vmem:[%s1317 + $0x12] sm:$0xff]
  %v1352 = vld [vmem:[%s1317 + $0x22] sm:$0xff]
  %v1353 = vld [vmem:[%s1317 + $0x32] sm:$0xff]
  %v1354 = vld [vmem:[%s1317 + $0x42] sm:$0xff]
  %v1355 = vld [vmem:[%s1317 + $0x52] sm:$0xff]
  %v1356 = vld [vmem:[%s1317 + $0x62] sm:$0xff]
  %v1357 = vld [vmem:[%s1317 + $0x72] sm:$0xff]
  %v1358 = vld [vmem:[%s1317 + $0xa2] sm:$0xff]
  %v1359 = vld [vmem:[%s1317 + $0xb2] sm:$0xff]
  %v1360 = vld [vmem:[%s1317 + $0xc2] sm:$0xff]
  %v1361 = vld [vmem:[%s1317 + $0xd2] sm:$0xff]
  %v1362 = vld [vmem:[%s1317 + $0xe2] sm:$0xff]
  %v1363 = vld [vmem:[%s1317 + $0xf2] sm:$0xff]
  %v1364 = vld [vmem:[%s1317 + $0x102] sm:$0xff]
  %v1365 = vld [vmem:[%s1317 + $0x112] sm:$0xff]
  %1382 = vrot.lane.b32.xlu0 %v1236, 32
  %v1383 = vpop.permute.xlu0 %1382
  %1384 = vrot.lane.b32.xlu0 %v1237, 32
  %v1385 = vpop.permute.xlu0 %1384
  %1386 = vrot.lane.b32.xlu0 %v1238, 32
  %v1387 = vpop.permute.xlu0 %1386
  %1388 = vrot.lane.b32.xlu0 %v1239, 32
  %v1389 = vpop.permute.xlu0 %1388
  %1390 = vrot.lane.b32.xlu0 %v1240, 32
  %v1391 = vpop.permute.xlu0 %1390
  %1392 = vrot.lane.b32.xlu0 %v1241, 32
  %v1393 = vpop.permute.xlu0 %1392
  %1394 = vrot.lane.b32.xlu0 %v1242, 32
  %v1395 = vpop.permute.xlu0 %1394
  %1396 = vrot.lane.b32.xlu0 %v1243, 32
  %v1397 = vpop.permute.xlu0 %1396
  %1398 = vrot.lane.b32.xlu0 %v1244, 32
  %v1399 = vpop.permute.xlu0 %1398
  %1400 = vrot.lane.b32.xlu0 %v1245, 32
  %v1401 = vpop.permute.xlu0 %1400
  %1402 = vrot.lane.b32.xlu0 %v1246, 32
  %v1403 = vpop.permute.xlu0 %1402
  %1404 = vrot.lane.b32.xlu0 %v1247, 32
  %v1405 = vpop.permute.xlu0 %1404
  %1406 = vrot.lane.b32.xlu0 %v1248, 32
  %v1407 = vpop.permute.xlu0 %1406
  %1408 = vrot.lane.b32.xlu0 %v1249, 32
  %v1409 = vpop.permute.xlu0 %1408
  %1410 = vrot.lane.b32.xlu0 %v1250, 32
  %v1411 = vpop.permute.xlu0 %1410
  %1412 = vrot.lane.b32.xlu0 %v1251, 32
  %v1413 = vpop.permute.xlu0 %1412
  %1446 = vrot.lane.b32.xlu0 %v1252, 64
  %v1447 = vpop.permute.xlu0 %1446
  %1448 = vrot.lane.b32.xlu0 %v1253, 64
  %v1449 = vpop.permute.xlu0 %1448
  %1450 = vrot.lane.b32.xlu0 %v1254, 64
  %v1451 = vpop.permute.xlu0 %1450
  %1452 = vrot.lane.b32.xlu0 %v1255, 64
  %v1453 = vpop.permute.xlu0 %1452
  %1454 = vrot.lane.b32.xlu0 %v1256, 64
  %v1455 = vpop.permute.xlu0 %1454
  %1456 = vrot.lane.b32.xlu0 %v1257, 64
  %v1457 = vpop.permute.xlu0 %1456
  %1458 = vrot.lane.b32.xlu0 %v1258, 64
  %v1459 = vpop.permute.xlu0 %1458
  %1460 = vrot.lane.b32.xlu0 %v1259, 64
  %v1461 = vpop.permute.xlu0 %1460
  %1462 = vrot.lane.b32.xlu0 %v1260, 64
  %v1463 = vpop.permute.xlu0 %1462
  %1464 = vrot.lane.b32.xlu0 %v1261, 64
  %v1465 = vpop.permute.xlu0 %1464
  %1466 = vrot.lane.b32.xlu0 %v1262, 64
  %v1467 = vpop.permute.xlu0 %1466
  %1468 = vrot.lane.b32.xlu0 %v1263, 64
  %v1469 = vpop.permute.xlu0 %1468
  %1470 = vrot.lane.b32.xlu0 %v1264, 64
  %v1471 = vpop.permute.xlu0 %1470
  %1472 = vrot.lane.b32.xlu0 %v1265, 64
  %v1473 = vpop.permute.xlu0 %1472
  %1474 = vrot.lane.b32.xlu0 %v1266, 64
  %v1475 = vpop.permute.xlu0 %1474
  %1476 = vrot.lane.b32.xlu0 %v1267, 64
  %v1477 = vpop.permute.xlu0 %1476
  %1510 = vrot.lane.b32.xlu0 %v1269, 96
  %v1511 = vpop.permute.xlu0 %1510
  %1512 = vrot.lane.b32.xlu0 %v1270, 96
  %v1513 = vpop.permute.xlu0 %1512
  %1514 = vrot.lane.b32.xlu0 %v1271, 96
  %v1515 = vpop.permute.xlu0 %1514
  %1516 = vrot.lane.b32.xlu0 %v1272, 96
  %v1517 = vpop.permute.xlu0 %1516
  %1518 = vrot.lane.b32.xlu0 %v1273, 96
  %v1519 = vpop.permute.xlu0 %1518
  %1520 = vrot.lane.b32.xlu0 %v1274, 96
  %v1521 = vpop.permute.xlu0 %1520
  %1522 = vrot.lane.b32.xlu0 %v1275, 96
  %v1523 = vpop.permute.xlu0 %1522
  %1524 = vrot.lane.b32.xlu0 %v1276, 96
  %v1525 = vpop.permute.xlu0 %1524
  %1526 = vrot.lane.b32.xlu0 %v1277, 96
  %v1527 = vpop.permute.xlu0 %1526
  %1528 = vrot.lane.b32.xlu0 %v1278, 96
  %v1529 = vpop.permute.xlu0 %1528
  %1530 = vrot.lane.b32.xlu0 %v1279, 96
  %v1531 = vpop.permute.xlu0 %1530
  %1532 = vrot.lane.b32.xlu0 %v1280, 96
  %v1533 = vpop.permute.xlu0 %1532
  %1534 = vrot.lane.b32.xlu0 %v1281, 96
  %v1535 = vpop.permute.xlu0 %1534
  %1536 = vrot.lane.b32.xlu0 %v1282, 96
  %v1537 = vpop.permute.xlu0 %1536
  %1538 = vrot.lane.b32.xlu0 %v1283, 96
  %v1539 = vpop.permute.xlu0 %1538
  %1540 = vrot.lane.b32.xlu0 %v1284, 96
  %v1541 = vpop.permute.xlu0 %1540
  %1574 = vrot.lane.b32.xlu0 %v1301, 32
  %v1575 = vpop.permute.xlu0 %1574
  %1576 = vrot.lane.b32.xlu0 %v1302, 32
  %v1577 = vpop.permute.xlu0 %1576
  %1578 = vrot.lane.b32.xlu0 %v1303, 32
  %v1579 = vpop.permute.xlu0 %1578
  %1580 = vrot.lane.b32.xlu0 %v1304, 32
  %v1581 = vpop.permute.xlu0 %1580
  %1582 = vrot.lane.b32.xlu0 %v1305, 32
  %v1583 = vpop.permute.xlu0 %1582
  %1584 = vrot.lane.b32.xlu0 %v1306, 32
  %v1585 = vpop.permute.xlu0 %1584
  %1586 = vrot.lane.b32.xlu0 %v1307, 32
  %v1587 = vpop.permute.xlu0 %1586
  %1588 = vrot.lane.b32.xlu0 %v1308, 32
  %v1589 = vpop.permute.xlu0 %1588
  %1590 = vrot.lane.b32.xlu0 %v1309, 32
  %v1591 = vpop.permute.xlu0 %1590
  %1592 = vrot.lane.b32.xlu0 %v1310, 32
  %v1593 = vpop.permute.xlu0 %1592
  %1594 = vrot.lane.b32.xlu0 %v1311, 32
  %v1595 = vpop.permute.xlu0 %1594
  %1596 = vrot.lane.b32.xlu0 %v1312, 32
  %v1597 = vpop.permute.xlu0 %1596
  %1598 = vrot.lane.b32.xlu0 %v1313, 32
  %v1599 = vpop.permute.xlu0 %1598
  %1600 = vrot.lane.b32.xlu0 %v1314, 32
  %v1601 = vpop.permute.xlu0 %1600
  %1602 = vrot.lane.b32.xlu0 %v1315, 32
  %v1603 = vpop.permute.xlu0 %1602
  %1604 = vrot.lane.b32.xlu0 %v1316, 32
  %v1605 = vpop.permute.xlu0 %1604
  %1638 = vrot.lane.b32.xlu0 %v1318, 64
  %v1639 = vpop.permute.xlu0 %1638
  %1640 = vrot.lane.b32.xlu0 %v1319, 64
  %v1641 = vpop.permute.xlu0 %1640
  %1642 = vrot.lane.b32.xlu0 %v1320, 64
  %v1643 = vpop.permute.xlu0 %1642
  %1644 = vrot.lane.b32.xlu0 %v1321, 64
  %v1645 = vpop.permute.xlu0 %1644
  %1646 = vrot.lane.b32.xlu0 %v1322, 64
  %v1647 = vpop.permute.xlu0 %1646
  %1648 = vrot.lane.b32.xlu0 %v1323, 64
  %v1649 = vpop.permute.xlu0 %1648
  %1650 = vrot.lane.b32.xlu0 %v1324, 64
  %v1651 = vpop.permute.xlu0 %1650
  %1652 = vrot.lane.b32.xlu0 %v1325, 64
  %v1653 = vpop.permute.xlu0 %1652
  %1654 = vrot.lane.b32.xlu0 %v1326, 64
  %v1655 = vpop.permute.xlu0 %1654
  %1656 = vrot.lane.b32.xlu0 %v1327, 64
  %v1657 = vpop.permute.xlu0 %1656
  %1658 = vrot.lane.b32.xlu0 %v1328, 64
  %v1659 = vpop.permute.xlu0 %1658
  %1660 = vrot.lane.b32.xlu0 %v1329, 64
  %v1661 = vpop.permute.xlu0 %1660
  %1662 = vrot.lane.b32.xlu0 %v1330, 64
  %v1663 = vpop.permute.xlu0 %1662
  %1664 = vrot.lane.b32.xlu0 %v1331, 64
  %v1665 = vpop.permute.xlu0 %1664
  %1666 = vrot.lane.b32.xlu0 %v1332, 64
  %v1667 = vpop.permute.xlu0 %1666
  %1668 = vrot.lane.b32.xlu0 %v1333, 64
  %v1669 = vpop.permute.xlu0 %1668
  %1702 = vrot.lane.b32.xlu0 %v1334, 96
  %v1703 = vpop.permute.xlu0 %1702
  %1704 = vrot.lane.b32.xlu0 %v1335, 96
  %v1705 = vpop.permute.xlu0 %1704
  %1706 = vrot.lane.b32.xlu0 %v1336, 96
  %v1707 = vpop.permute.xlu0 %1706
  %1708 = vrot.lane.b32.xlu0 %v1337, 96
  %v1709 = vpop.permute.xlu0 %1708
  %1710 = vrot.lane.b32.xlu0 %v1338, 96
  %v1711 = vpop.permute.xlu0 %1710
  %1712 = vrot.lane.b32.xlu0 %v1339, 96
  %v1713 = vpop.permute.xlu0 %1712
  %1714 = vrot.lane.b32.xlu0 %v1340, 96
  %v1715 = vpop.permute.xlu0 %1714
  %1716 = vrot.lane.b32.xlu0 %v1341, 96
  %v1717 = vpop.permute.xlu0 %1716
  %1718 = vrot.lane.b32.xlu0 %v1342, 96
  %v1719 = vpop.permute.xlu0 %1718
  %1720 = vrot.lane.b32.xlu0 %v1343, 96
  %v1721 = vpop.permute.xlu0 %1720
  %1722 = vrot.lane.b32.xlu0 %v1344, 96
  %v1723 = vpop.permute.xlu0 %1722
  %1724 = vrot.lane.b32.xlu0 %v1345, 96
  %v1725 = vpop.permute.xlu0 %1724
  %1726 = vrot.lane.b32.xlu0 %v1346, 96
  %v1727 = vpop.permute.xlu0 %1726
  %1728 = vrot.lane.b32.xlu0 %v1347, 96
  %v1729 = vpop.permute.xlu0 %1728
  %1730 = vrot.lane.b32.xlu0 %v1348, 96
  %v1731 = vpop.permute.xlu0 %1730
  %1732 = vrot.lane.b32.xlu0 %v1349, 96
  %v1733 = vpop.permute.xlu0 %1732
  %v1750 = vsel %vm131, %v1220, %v1383
  %v1751 = vsel %vm131, %v1221, %v1385
  %v1752 = vsel %vm131, %v1222, %v1387
  %v1753 = vsel %vm131, %v1223, %v1389
  %v1754 = vsel %vm131, %v1224, %v1391
  %v1755 = vsel %vm131, %v1225, %v1393
  %v1756 = vsel %vm131, %v1226, %v1395
  %v1757 = vsel %vm131, %v1227, %v1397
  %v1758 = vsel %vm131, %v1228, %v1399
  %v1759 = vsel %vm131, %v1229, %v1401
  %v1760 = vsel %vm131, %v1230, %v1403
  %v1761 = vsel %vm131, %v1231, %v1405
  %v1762 = vsel %vm131, %v1232, %v1407
  %v1763 = vsel %vm131, %v1233, %v1409
  %v1764 = vsel %vm131, %v1234, %v1411
  %v1765 = vsel %vm131, %v1235, %v1413
  %v1766 = vsel %vm719, %v1750, %v1447
  %v1767 = vsel %vm719, %v1751, %v1449
  %v1768 = vsel %vm719, %v1752, %v1451
  %v1769 = vsel %vm719, %v1753, %v1453
  %v1770 = vsel %vm719, %v1754, %v1455
  %v1771 = vsel %vm719, %v1755, %v1457
  %v1772 = vsel %vm719, %v1756, %v1459
  %v1773 = vsel %vm719, %v1757, %v1461
  %v1774 = vsel %vm719, %v1758, %v1463
  %v1775 = vsel %vm719, %v1759, %v1465
  %v1776 = vsel %vm719, %v1760, %v1467
  %v1777 = vsel %vm719, %v1761, %v1469
  %v1778 = vsel %vm719, %v1762, %v1471
  %v1779 = vsel %vm719, %v1763, %v1473
  %v1780 = vsel %vm719, %v1764, %v1475
  %v1781 = vsel %vm719, %v1765, %v1477
  %v1782 = vsel %vm736, %v1766, %v1511
  %v1783 = vsel %vm736, %v1767, %v1513
  %v1784 = vsel %vm736, %v1768, %v1515
  %v1785 = vsel %vm736, %v1769, %v1517
  %v1786 = vsel %vm736, %v1770, %v1519
  %v1787 = vsel %vm736, %v1771, %v1521
  %v1788 = vsel %vm736, %v1772, %v1523
  %v1789 = vsel %vm736, %v1773, %v1525
  %v1790 = vsel %vm736, %v1774, %v1527
  %v1791 = vsel %vm736, %v1775, %v1529
  %v1792 = vsel %vm736, %v1776, %v1531
  %v1793 = vsel %vm736, %v1777, %v1533
  %v1794 = vsel %vm736, %v1778, %v1535
  %v1795 = vsel %vm736, %v1779, %v1537
  %v1796 = vsel %vm736, %v1780, %v1539
  %v1797 = vsel %vm736, %v1781, %v1541
  %v1798 = vsel %vm131, %v1285, %v1575
  %v1799 = vsel %vm131, %v1286, %v1577
  %v1800 = vsel %vm131, %v1287, %v1579
  %v1801 = vsel %vm131, %v1288, %v1581
  %v1802 = vsel %vm131, %v1289, %v1583
  %v1803 = vsel %vm131, %v1290, %v1585
  %v1804 = vsel %vm131, %v1291, %v1587
  %v1805 = vsel %vm131, %v1292, %v1589
  %v1806 = vsel %vm131, %v1293, %v1591
  %v1807 = vsel %vm131, %v1294, %v1593
  %v1808 = vsel %vm131, %v1295, %v1595
  %v1809 = vsel %vm131, %v1296, %v1597
  %v1810 = vsel %vm131, %v1297, %v1599
  %v1811 = vsel %vm131, %v1298, %v1601
  %v1812 = vsel %vm131, %v1299, %v1603
  %v1813 = vsel %vm131, %v1300, %v1605
  %v1814 = vsel %vm719, %v1798, %v1639
  %v1815 = vsel %vm719, %v1799, %v1641
  %v1816 = vsel %vm719, %v1800, %v1643
  %v1817 = vsel %vm719, %v1801, %v1645
  %v1818 = vsel %vm719, %v1802, %v1647
  %v1819 = vsel %vm719, %v1803, %v1649
  %v1820 = vsel %vm719, %v1804, %v1651
  %v1821 = vsel %vm719, %v1805, %v1653
  %v1822 = vsel %vm719, %v1806, %v1655
  %v1823 = vsel %vm719, %v1807, %v1657
  %v1824 = vsel %vm719, %v1808, %v1659
  %v1825 = vsel %vm719, %v1809, %v1661
  %v1826 = vsel %vm719, %v1810, %v1663
  %v1827 = vsel %vm719, %v1811, %v1665
  %v1828 = vsel %vm719, %v1812, %v1667
  %v1829 = vsel %vm719, %v1813, %v1669
  %v1830 = vsel %vm736, %v1814, %v1703
  %v1831 = vsel %vm736, %v1815, %v1705
  %v1832 = vsel %vm736, %v1816, %v1707
  %v1833 = vsel %vm736, %v1817, %v1709
  %v1834 = vsel %vm736, %v1818, %v1711
  %v1835 = vsel %vm736, %v1819, %v1713
  %v1836 = vsel %vm736, %v1820, %v1715
  %v1837 = vsel %vm736, %v1821, %v1717
  %v1838 = vsel %vm736, %v1822, %v1719
  %v1839 = vsel %vm736, %v1823, %v1721
  %v1840 = vsel %vm736, %v1824, %v1723
  %v1841 = vsel %vm736, %v1825, %v1725
  %v1842 = vsel %vm736, %v1826, %v1727
  %v1843 = vsel %vm736, %v1827, %v1729
  %v1844 = vsel %vm736, %v1828, %v1731
  %v1845 = vsel %vm736, %v1829, %v1733
  %v1846 = vld [vmem:[%s3] sm:$0xff]
  %v1847 = vld [vmem:[%s3 + $0x8] sm:$0xff]
  %v1848 = vld [vmem:[%s3 + $0x10] sm:$0xff]
  %v1849 = vld [vmem:[%s3 + $0x18] sm:$0xff]
  %v1850 = vld [vmem:[%s3 + $0x20] sm:$0xff]
  %v1851 = vld [vmem:[%s3 + $0x28] sm:$0xff]
  %v1852 = vld [vmem:[%s3 + $0x30] sm:$0xff]
  %v1853 = vld [vmem:[%s3 + $0x38] sm:$0xff]
  %v1854 = vld [vmem:[%s3 + $0x40] sm:$0xff]
  %v1855 = vld [vmem:[%s3 + $0x48] sm:$0xff]
  %v1856 = vld [vmem:[%s3 + $0x50] sm:$0xff]
  %v1857 = vld [vmem:[%s3 + $0x58] sm:$0xff]
  %v1858 = vld [vmem:[%s3 + $0x60] sm:$0xff]
  %v1859 = vld [vmem:[%s3 + $0x68] sm:$0xff]
  %v1860 = vld [vmem:[%s3 + $0x70] sm:$0xff]
  %v1861 = vld [vmem:[%s3 + $0x78] sm:$0xff]
  %v1862 = vld [vmem:[%s3 + $0x80] sm:$0xff]
  %v1863 = vld [vmem:[%s3 + $0x88] sm:$0xff]
  %v1864 = vld [vmem:[%s3 + $0x90] sm:$0xff]
  %v1865 = vld [vmem:[%s3 + $0x98] sm:$0xff]
  %v1866 = vld [vmem:[%s3 + $0xa0] sm:$0xff]
  %v1867 = vld [vmem:[%s3 + $0xa8] sm:$0xff]
  %v1868 = vld [vmem:[%s3 + $0xb0] sm:$0xff]
  %v1869 = vld [vmem:[%s3 + $0xb8] sm:$0xff]
  %v1870 = vld [vmem:[%s3 + $0xc0] sm:$0xff]
  %v1871 = vld [vmem:[%s3 + $0xc8] sm:$0xff]
  %v1872 = vld [vmem:[%s3 + $0xd0] sm:$0xff]
  %v1873 = vld [vmem:[%s3 + $0xd8] sm:$0xff]
  %v1874 = vld [vmem:[%s3 + $0xe0] sm:$0xff]
  %v1875 = vld [vmem:[%s3 + $0xe8] sm:$0xff]
  %v1876 = vld [vmem:[%s3 + $0xf0] sm:$0xff]
  %v1877 = vld [vmem:[%s3 + $0xf8] sm:$0xff]
  %v1878 = vld [vmem:[%s3 + $0x100] sm:$0xff]
  %v1879 = vld [vmem:[%s3 + $0x108] sm:$0xff]
  %v1880 = vld [vmem:[%s3 + $0x110] sm:$0xff]
  %v1881 = vld [vmem:[%s3 + $0x118] sm:$0xff]
  %v1882 = vld [vmem:[%s4] sm:$0x1]
  %v1884 = vperm.slane %v1882, 0
  %v1887 = vsel %vm131, %v1350, 0
  %v1890 = vsel %vm131, %v1351, 0
  %v1893 = vsel %vm131, %v1352, 0
  %v1896 = vsel %vm131, %v1353, 0
  %v1899 = vsel %vm131, %v1354, 0
  %v1902 = vsel %vm131, %v1355, 0
  %v1905 = vsel %vm131, %v1356, 0
  %v1908 = vsel %vm131, %v1357, 0
  %v1911 = vsel %vm131, %v1358, 0
  %v1914 = vsel %vm131, %v1359, 0
  %v1917 = vsel %vm131, %v1360, 0
  %v1920 = vsel %vm131, %v1361, 0
  %v1923 = vsel %vm131, %v1362, 0
  %v1926 = vsel %vm131, %v1363, 0
  %v1929 = vsel %vm131, %v1364, 0
  %v1932 = vsel %vm131, %v1365, 0
  %1934 = vmatpush.msra.mxu0 %v1861
  %1935 = vmatpush.msra.mxu0 %v1860
  %1936 = vmatpush.msra.mxu0 %v1859
  %1937 = vmatpush.msra.mxu0 %v1858
  %1938 = vmatpush.msra.mxu0 %v1857
  %1939 = vmatpush.msra.mxu0 %v1856
  %1940 = vmatpush.msra.mxu0 %v1855
  %1941 = vmatpush.msra.mxu0 %v1854
  %1942 = vmatpush.msra.mxu0 %v1853
  %1943 = vmatpush.msra.mxu0 %v1852
  %1944 = vmatpush.msra.mxu0 %v1851
  %1945 = vmatpush.msra.mxu0 %v1850
  %1946 = vmatpush.msra.mxu0 %v1849
  %1947 = vmatpush.msra.mxu0 %v1848
  %1948 = vmatpush.msra.mxu0 %v1847
  %1949 = vmatpush.msra.mxu0 %v1846
  %1950 = vmatmul.f32.gmra.mxu0 %v1782
  %v1951 = vpop.f32.mrf.mxu0
  %v1952 = vadd.f32 %v1884, %v1951
  %1953 = vmatmul.f32.gmra.mxu0 %v1783
  %v1954 = vpop.f32.mrf.mxu0
  %v1955 = vadd.f32 %v1884, %v1954
  %1956 = vmatmul.f32.gmra.mxu0 %v1784
  %v1957 = vpop.f32.mrf.mxu0
  %v1958 = vadd.f32 %v1884, %v1957
  %1959 = vmatmul.f32.gmra.mxu0 %v1785
  %v1960 = vpop.f32.mrf.mxu0
  %v1961 = vadd.f32 %v1884, %v1960
  %1962 = vmatmul.f32.gmra.mxu0 %v1786
  %v1963 = vpop.f32.mrf.mxu0
  %v1964 = vadd.f32 %v1884, %v1963
  %1965 = vmatmul.f32.gmra.mxu0 %v1787
  %v1966 = vpop.f32.mrf.mxu0
  %v1967 = vadd.f32 %v1884, %v1966
  %1968 = vmatmul.f32.gmra.mxu0 %v1788
  %v1969 = vpop.f32.mrf.mxu0
  %v1970 = vadd.f32 %v1884, %v1969
  %1971 = vmatmul.f32.gmra.mxu0 %v1789
  %v1972 = vpop.f32.mrf.mxu0
  %v1973 = vadd.f32 %v1884, %v1972
  %1974 = vmatmul.f32.gmra.mxu0 %v1790
  %v1975 = vpop.f32.mrf.mxu0
  %v1976 = vadd.f32 %v1884, %v1975
  %1977 = vmatmul.f32.gmra.mxu0 %v1791
  %v1978 = vpop.f32.mrf.mxu0
  %v1979 = vadd.f32 %v1884, %v1978
  %1980 = vmatmul.f32.gmra.mxu0 %v1792
  %v1981 = vpop.f32.mrf.mxu0
  %v1982 = vadd.f32 %v1884, %v1981
  %1983 = vmatmul.f32.gmra.mxu0 %v1793
  %v1984 = vpop.f32.mrf.mxu0
  %v1985 = vadd.f32 %v1884, %v1984
  %1986 = vmatmul.f32.gmra.mxu0 %v1794
  %v1987 = vpop.f32.mrf.mxu0
  %v1988 = vadd.f32 %v1884, %v1987
  %1989 = vmatmul.f32.gmra.mxu0 %v1795
  %v1990 = vpop.f32.mrf.mxu0
  %v1991 = vadd.f32 %v1884, %v1990
  %1992 = vmatmul.f32.gmra.mxu0 %v1796
  %v1993 = vpop.f32.mrf.mxu0
  %v1994 = vadd.f32 %v1884, %v1993
  %1995 = vmatmul.f32.gmra.mxu0 %v1797
  %v1996 = vpop.f32.mrf.mxu0
  %v1997 = vadd.f32 %v1884, %v1996
  %1998 = vdwg.mxu0
  %1999 = vmatpush.msra.mxu0 %v1877
  %2000 = vmatpush.msra.mxu0 %v1876
  %2001 = vmatpush.msra.mxu0 %v1875
  %2002 = vmatpush.msra.mxu0 %v1874
  %2003 = vmatpush.msra.mxu0 %v1873
  %2004 = vmatpush.msra.mxu0 %v1872
  %2005 = vmatpush.msra.mxu0 %v1871
  %2006 = vmatpush.msra.mxu0 %v1870
  %2007 = vmatpush.msra.mxu0 %v1869
  %2008 = vmatpush.msra.mxu0 %v1868
  %2009 = vmatpush.msra.mxu0 %v1867
  %2010 = vmatpush.msra.mxu0 %v1866
  %2011 = vmatpush.msra.mxu0 %v1865
  %2012 = vmatpush.msra.mxu0 %v1864
  %2013 = vmatpush.msra.mxu0 %v1863
  %2014 = vmatpush.msra.mxu0 %v1862
  %2015 = vmatmul.f32.gmra.mxu0 %v1830
  %v2016 = vpop.f32.mrf.mxu0
  %v2017 = vadd.f32 %v1952, %v2016
  %2018 = vmatmul.f32.gmra.mxu0 %v1831
  %v2019 = vpop.f32.mrf.mxu0
  %v2020 = vadd.f32 %v1955, %v2019
  %2021 = vmatmul.f32.gmra.mxu0 %v1832
  %v2022 = vpop.f32.mrf.mxu0
  %v2023 = vadd.f32 %v1958, %v2022
  %2024 = vmatmul.f32.gmra.mxu0 %v1833
  %v2025 = vpop.f32.mrf.mxu0
  %v2026 = vadd.f32 %v1961, %v2025
  %2027 = vmatmul.f32.gmra.mxu0 %v1834
  %v2028 = vpop.f32.mrf.mxu0
  %v2029 = vadd.f32 %v1964, %v2028
  %2030 = vmatmul.f32.gmra.mxu0 %v1835
  %v2031 = vpop.f32.mrf.mxu0
  %v2032 = vadd.f32 %v1967, %v2031
  %2033 = vmatmul.f32.gmra.mxu0 %v1836
  %v2034 = vpop.f32.mrf.mxu0
  %v2035 = vadd.f32 %v1970, %v2034
  %2036 = vmatmul.f32.gmra.mxu0 %v1837
  %v2037 = vpop.f32.mrf.mxu0
  %v2038 = vadd.f32 %v1973, %v2037
  %2039 = vmatmul.f32.gmra.mxu0 %v1838
  %v2040 = vpop.f32.mrf.mxu0
  %v2041 = vadd.f32 %v1976, %v2040
  %2042 = vmatmul.f32.gmra.mxu0 %v1839
  %v2043 = vpop.f32.mrf.mxu0
  %v2044 = vadd.f32 %v1979, %v2043
  %2045 = vmatmul.f32.gmra.mxu0 %v1840
  %v2046 = vpop.f32.mrf.mxu0
  %v2047 = vadd.f32 %v1982, %v2046
  %2048 = vmatmul.f32.gmra.mxu0 %v1841
  %v2049 = vpop.f32.mrf.mxu0
  %v2050 = vadd.f32 %v1985, %v2049
  %2051 = vmatmul.f32.gmra.mxu0 %v1842
  %v2052 = vpop.f32.mrf.mxu0
  %v2053 = vadd.f32 %v1988, %v2052
  %2054 = vmatmul.f32.gmra.mxu0 %v1843
  %v2055 = vpop.f32.mrf.mxu0
  %v2056 = vadd.f32 %v1991, %v2055
  %2057 = vmatmul.f32.gmra.mxu0 %v1844
  %v2058 = vpop.f32.mrf.mxu0
  %v2059 = vadd.f32 %v1994, %v2058
  %2060 = vmatmul.f32.gmra.mxu0 %v1845
  %v2061 = vpop.f32.mrf.mxu0
  %v2062 = vadd.f32 %v1997, %v2061
  %2063 = vdwg.mxu0
  %2064 = vmatpush.msra.mxu0 0.0
  %2065 = vmatpush.msra.mxu0 0.0
  %2066 = vmatpush.msra.mxu0 0.0
  %2067 = vmatpush.msra.mxu0 0.0
  %2068 = vmatpush.msra.mxu0 0.0
  %2069 = vmatpush.msra.mxu0 0.0
  %2070 = vmatpush.msra.mxu0 0.0
  %2071 = vmatpush.msra.mxu0 0.0
  %2072 = vmatpush.msra.mxu0 0.0
  %2073 = vmatpush.msra.mxu0 0.0
  %2074 = vmatpush.msra.mxu0 0.0
  %2075 = vmatpush.msra.mxu0 0.0
  %2076 = vmatpush.msra.mxu0 %v1881
  %2077 = vmatpush.msra.mxu0 %v1880
  %2078 = vmatpush.msra.mxu0 %v1879
  %2079 = vmatpush.msra.mxu0 %v1878
  %2080 = vmatmul.f32.gmra.mxu0 %v1887
  %v2081 = vpop.f32.mrf.mxu0
  %v2082 = vadd.f32 %v2017, %v2081
  %2083 = vmatmul.f32.gmra.mxu0 %v1890
  %v2084 = vpop.f32.mrf.mxu0
  %v2085 = vadd.f32 %v2020, %v2084
  %2086 = vmatmul.f32.gmra.mxu0 %v1893
  %v2087 = vpop.f32.mrf.mxu0
  %v2088 = vadd.f32 %v2023, %v2087
  %2089 = vmatmul.f32.gmra.mxu0 %v1896
  %v2090 = vpop.f32.mrf.mxu0
  %v2091 = vadd.f32 %v2026, %v2090
  %2092 = vmatmul.f32.gmra.mxu0 %v1899
  %v2093 = vpop.f32.mrf.mxu0
  %v2094 = vadd.f32 %v2029, %v2093
  %2095 = vmatmul.f32.gmra.mxu0 %v1902
  %v2096 = vpop.f32.mrf.mxu0
  %v2097 = vadd.f32 %v2032, %v2096
  %2098 = vmatmul.f32.gmra.mxu0 %v1905
  %v2099 = vpop.f32.mrf.mxu0
  %v2100 = vadd.f32 %v2035, %v2099
  %2101 = vmatmul.f32.gmra.mxu0 %v1908
  %v2102 = vpop.f32.mrf.mxu0
  %v2103 = vadd.f32 %v2038, %v2102
  %2104 = vmatmul.f32.gmra.mxu0 %v1911
  %v2105 = vpop.f32.mrf.mxu0
  %v2106 = vadd.f32 %v2041, %v2105
  %2107 = vmatmul.f32.gmra.mxu0 %v1914
  %v2108 = vpop.f32.mrf.mxu0
  %v2109 = vadd.f32 %v2044, %v2108
  %2110 = vmatmul.f32.gmra.mxu0 %v1917
  %v2111 = vpop.f32.mrf.mxu0
  %v2112 = vadd.f32 %v2047, %v2111
  %2113 = vmatmul.f32.gmra.mxu0 %v1920
  %v2114 = vpop.f32.mrf.mxu0
  %v2115 = vadd.f32 %v2050, %v2114
  %2116 = vmatmul.f32.gmra.mxu0 %v1923
  %v2117 = vpop.f32.mrf.mxu0
  %v2118 = vadd.f32 %v2053, %v2117
  %2119 = vmatmul.f32.gmra.mxu0 %v1926
  %v2120 = vpop.f32.mrf.mxu0
  %v2121 = vadd.f32 %v2056, %v2120
  %2122 = vmatmul.f32.gmra.mxu0 %v1929
  %v2123 = vpop.f32.mrf.mxu0
  %v2124 = vadd.f32 %v2059, %v2123
  %2125 = vmatmul.f32.gmra.mxu0 %v1932
  %v2126 = vpop.f32.mrf.mxu0
  %v2127 = vadd.f32 %v2062, %v2126
  %2128 = vdwg.mxu0
  %v2129 = vmax.f32 %v2082, 0.0
  %v2130 = vmax.f32 %v2085, 0.0
  %v2131 = vmax.f32 %v2088, 0.0
  %v2132 = vmax.f32 %v2091, 0.0
  %v2133 = vmax.f32 %v2094, 0.0
  %v2134 = vmax.f32 %v2097, 0.0
  %v2135 = vmax.f32 %v2100, 0.0
  %v2136 = vmax.f32 %v2103, 0.0
  %v2137 = vmax.f32 %v2106, 0.0
  %v2138 = vmax.f32 %v2109, 0.0
  %v2139 = vmax.f32 %v2112, 0.0
  %v2140 = vmax.f32 %v2115, 0.0
  %v2141 = vmax.f32 %v2118, 0.0
  %v2142 = vmax.f32 %v2121, 0.0
  %v2143 = vmax.f32 %v2124, 0.0
  %v2144 = vmax.f32 %v2127, 0.0
  %v2145 = vld [vmem:[%s5] sm:$0xff]
  %v2146 = vld [vmem:[%s5 + $0x8] sm:$0xff]
  %v2147 = vld [vmem:[%s5 + $0x10] sm:$0xff]
  %v2148 = vld [vmem:[%s5 + $0x18] sm:$0xff]
  %v2149 = vld [vmem:[%s6] sm:$0x1]
  %v2151 = vperm.slane %v2149, 0
  %v2154 = vsel %vm131, %v2129, 0
  %v2157 = vsel %vm131, %v2130, 0
  %v2160 = vsel %vm131, %v2131, 0
  %v2163 = vsel %vm131, %v2132, 0
  %v2166 = vsel %vm131, %v2133, 0
  %v2169 = vsel %vm131, %v2134, 0
  %v2172 = vsel %vm131, %v2135, 0
  %v2175 = vsel %vm131, %v2136, 0
  %v2178 = vsel %vm131, %v2137, 0
  %v2181 = vsel %vm131, %v2138, 0
  %v2184 = vsel %vm131, %v2139, 0
  %v2187 = vsel %vm131, %v2140, 0
  %v2190 = vsel %vm131, %v2141, 0
  %v2193 = vsel %vm131, %v2142, 0
  %v2196 = vsel %vm131, %v2143, 0
  %v2199 = vsel %vm131, %v2144, 0
  %2201 = vmatpush.msra.mxu0 0.0
  %2202 = vmatpush.msra.mxu0 0.0
  %2203 = vmatpush.msra.mxu0 0.0
  %2204 = vmatpush.msra.mxu0 0.0
  %2205 = vmatpush.msra.mxu0 0.0
  %2206 = vmatpush.msra.mxu0 0.0
  %2207 = vmatpush.msra.mxu0 0.0
  %2208 = vmatpush.msra.mxu0 0.0
  %2209 = vmatpush.msra.mxu0 0.0
  %2210 = vmatpush.msra.mxu0 0.0
  %2211 = vmatpush.msra.mxu0 0.0
  %2212 = vmatpush.msra.mxu0 0.0
  %2213 = vmatpush.msra.mxu0 %v2148
  %2214 = vmatpush.msra.mxu0 %v2147
  %2215 = vmatpush.msra.mxu0 %v2146
  %2216 = vmatpush.msra.mxu0 %v2145
  %2217 = vmatmul.f32.gmra.mxu0 %v2154
  %v2218 = vpop.f32.mrf.mxu0
  %v2219 = vadd.f32 %v2151, %v2218
  %2220 = vmatmul.f32.gmra.mxu0 %v2157
  %v2221 = vpop.f32.mrf.mxu0
  %v2222 = vadd.f32 %v2151, %v2221
  %2223 = vmatmul.f32.gmra.mxu0 %v2160
  %v2224 = vpop.f32.mrf.mxu0
  %v2225 = vadd.f32 %v2151, %v2224
  %2226 = vmatmul.f32.gmra.mxu0 %v2163
  %v2227 = vpop.f32.mrf.mxu0
  %v2228 = vadd.f32 %v2151, %v2227
  %2229 = vmatmul.f32.gmra.mxu0 %v2166
  %v2230 = vpop.f32.mrf.mxu0
  %v2231 = vadd.f32 %v2151, %v2230
  %2232 = vmatmul.f32.gmra.mxu0 %v2169
  %v2233 = vpop.f32.mrf.mxu0
  %v2234 = vadd.f32 %v2151, %v2233
  %2235 = vmatmul.f32.gmra.mxu0 %v2172
  %v2236 = vpop.f32.mrf.mxu0
  %v2237 = vadd.f32 %v2151, %v2236
  %2238 = vmatmul.f32.gmra.mxu0 %v2175
  %v2239 = vpop.f32.mrf.mxu0
  %v2240 = vadd.f32 %v2151, %v2239
  %2241 = vmatmul.f32.gmra.mxu0 %v2178
  %v2242 = vpop.f32.mrf.mxu0
  %v2243 = vadd.f32 %v2151, %v2242
  %2244 = vmatmul.f32.gmra.mxu0 %v2181
  %v2245 = vpop.f32.mrf.mxu0
  %v2246 = vadd.f32 %v2151, %v2245
  %2247 = vmatmul.f32.gmra.mxu0 %v2184
  %v2248 = vpop.f32.mrf.mxu0
  %v2249 = vadd.f32 %v2151, %v2248
  %2250 = vmatmul.f32.gmra.mxu0 %v2187
  %v2251 = vpop.f32.mrf.mxu0
  %v2252 = vadd.f32 %v2151, %v2251
  %2253 = vmatmul.f32.gmra.mxu0 %v2190
  %v2254 = vpop.f32.mrf.mxu0
  %v2255 = vadd.f32 %v2151, %v2254
  %2256 = vmatmul.f32.gmra.mxu0 %v2193
  %v2257 = vpop.f32.mrf.mxu0
  %v2258 = vadd.f32 %v2151, %v2257
  %2259 = vmatmul.f32.gmra.mxu0 %v2196
  %v2260 = vpop.f32.mrf.mxu0
  %v2261 = vadd.f32 %v2151, %v2260
  %2262 = vmatmul.f32.gmra.mxu0 %v2199
  %v2263 = vpop.f32.mrf.mxu0
  %v2264 = vadd.f32 %v2151, %v2263
  %2265 = vdwg.mxu0
  %v2266 = vmax.f32 %v2219, 0.0
  %v2267 = vmax.f32 %v2222, 0.0
  %v2268 = vmax.f32 %v2225, 0.0
  %v2269 = vmax.f32 %v2228, 0.0
  %v2270 = vmax.f32 %v2231, 0.0
  %v2271 = vmax.f32 %v2234, 0.0
  %v2272 = vmax.f32 %v2237, 0.0
  %v2273 = vmax.f32 %v2240, 0.0
  %v2274 = vmax.f32 %v2243, 0.0
  %v2275 = vmax.f32 %v2246, 0.0
  %v2276 = vmax.f32 %v2249, 0.0
  %v2277 = vmax.f32 %v2252, 0.0
  %v2278 = vmax.f32 %v2255, 0.0
  %v2279 = vmax.f32 %v2258, 0.0
  %v2280 = vmax.f32 %v2261, 0.0
  %v2281 = vmax.f32 %v2264, 0.0
  %v2282 = vld [vmem:[%s7] sm:$0xff]
  %v2283 = vld [vmem:[%s7 + $0x8] sm:$0xff]
  %v2284 = vld [vmem:[%s7 + $0x10] sm:$0xff]
  %v2285 = vld [vmem:[%s7 + $0x18] sm:$0xff]
  %v2286 = vld [vmem:[%s7 + $0x20] sm:$0xff]
  %v2287 = vld [vmem:[%s7 + $0x28] sm:$0xff]
  %v2288 = vld [vmem:[%s7 + $0x30] sm:$0xff]
  %v2289 = vld [vmem:[%s7 + $0x38] sm:$0xff]
  %v2290 = vld [vmem:[%s7 + $0x40] sm:$0xff]
  %v2291 = vld [vmem:[%s7 + $0x48] sm:$0xff]
  %v2292 = vld [vmem:[%s7 + $0x50] sm:$0xff]
  %v2293 = vld [vmem:[%s7 + $0x58] sm:$0xff]
  %v2294 = vld [vmem:[%s7 + $0x60] sm:$0xff]
  %v2295 = vld [vmem:[%s7 + $0x68] sm:$0xff]
  %v2296 = vld [vmem:[%s7 + $0x70] sm:$0xff]
  %v2297 = vld [vmem:[%s7 + $0x78] sm:$0xff]
  %v2298 = vld [vmem:[%s8] sm:$0x1]
  %v2300 = vperm.slane %v2298, 0
  %2302 = vmatpush.msra.mxu0 %v2297
  %2303 = vmatpush.msra.mxu0 %v2296
  %2304 = vmatpush.msra.mxu0 %v2295
  %2305 = vmatpush.msra.mxu0 %v2294
  %2306 = vmatpush.msra.mxu0 %v2293
  %2307 = vmatpush.msra.mxu0 %v2292
  %2308 = vmatpush.msra.mxu0 %v2291
  %2309 = vmatpush.msra.mxu0 %v2290
  %2310 = vmatpush.msra.mxu0 %v2289
  %2311 = vmatpush.msra.mxu0 %v2288
  %2312 = vmatpush.msra.mxu0 %v2287
  %2313 = vmatpush.msra.mxu0 %v2286
  %2314 = vmatpush.msra.mxu0 %v2285
  %2315 = vmatpush.msra.mxu0 %v2284
  %2316 = vmatpush.msra.mxu0 %v2283
  %2317 = vmatpush.msra.mxu0 %v2282
  %2318 = vmatmul.f32.gmra.mxu0 %v2266
  %v2319 = vpop.f32.mrf.mxu0
  %v2320 = vadd.f32 %v2300, %v2319
  %2321 = vmatmul.f32.gmra.mxu0 %v2267
  %v2322 = vpop.f32.mrf.mxu0
  %v2323 = vadd.f32 %v2300, %v2322
  %2324 = vmatmul.f32.gmra.mxu0 %v2268
  %v2325 = vpop.f32.mrf.mxu0
  %v2326 = vadd.f32 %v2300, %v2325
  %2327 = vmatmul.f32.gmra.mxu0 %v2269
  %v2328 = vpop.f32.mrf.mxu0
  %v2329 = vadd.f32 %v2300, %v2328
  %2330 = vmatmul.f32.gmra.mxu0 %v2270
  %v2331 = vpop.f32.mrf.mxu0
  %v2332 = vadd.f32 %v2300, %v2331
  %2333 = vmatmul.f32.gmra.mxu0 %v2271
  %v2334 = vpop.f32.mrf.mxu0
  %v2335 = vadd.f32 %v2300, %v2334
  %2336 = vmatmul.f32.gmra.mxu0 %v2272
  %v2337 = vpop.f32.mrf.mxu0
  %v2338 = vadd.f32 %v2300, %v2337
  %2339 = vmatmul.f32.gmra.mxu0 %v2273
  %v2340 = vpop.f32.mrf.mxu0
  %v2341 = vadd.f32 %v2300, %v2340
  %2342 = vmatmul.f32.gmra.mxu0 %v2274
  %v2343 = vpop.f32.mrf.mxu0
  %v2344 = vadd.f32 %v2300, %v2343
  %2345 = vmatmul.f32.gmra.mxu0 %v2275
  %v2346 = vpop.f32.mrf.mxu0
  %v2347 = vadd.f32 %v2300, %v2346
  %2348 = vmatmul.f32.gmra.mxu0 %v2276
  %v2349 = vpop.f32.mrf.mxu0
  %v2350 = vadd.f32 %v2300, %v2349
  %2351 = vmatmul.f32.gmra.mxu0 %v2277
  %v2352 = vpop.f32.mrf.mxu0
  %v2353 = vadd.f32 %v2300, %v2352
  %2354 = vmatmul.f32.gmra.mxu0 %v2278
  %v2355 = vpop.f32.mrf.mxu0
  %v2356 = vadd.f32 %v2300, %v2355
  %2357 = vmatmul.f32.gmra.mxu0 %v2279
  %v2358 = vpop.f32.mrf.mxu0
  %v2359 = vadd.f32 %v2300, %v2358
  %2360 = vmatmul.f32.gmra.mxu0 %v2280
  %v2361 = vpop.f32.mrf.mxu0
  %v2362 = vadd.f32 %v2300, %v2361
  %2363 = vmatmul.f32.gmra.mxu0 %v2281
  %v2364 = vpop.f32.mrf.mxu0
  %v2365 = vadd.f32 %v2300, %v2364
  %2366 = vdwg.mxu0
  %2367 = vst.msk [vmem:[%s9] sm:$0xff] %vm719, %v2320
  %2368 = vst.msk [vmem:[%s9 + $0x8] sm:$0xff] %vm719, %v2323
  %2369 = vst.msk [vmem:[%s9 + $0x10] sm:$0xff] %vm719, %v2326
  %2370 = vst.msk [vmem:[%s9 + $0x18] sm:$0xff] %vm719, %v2329
  %2371 = vst.msk [vmem:[%s9 + $0x20] sm:$0xff] %vm719, %v2332
  %2372 = vst.msk [vmem:[%s9 + $0x28] sm:$0xff] %vm719, %v2335
  %2373 = vst.msk [vmem:[%s9 + $0x30] sm:$0xff] %vm719, %v2338
  %2374 = vst.msk [vmem:[%s9 + $0x38] sm:$0xff] %vm719, %v2341
  %2375 = vst.msk [vmem:[%s9 + $0x40] sm:$0xff] %vm719, %v2344
  %2376 = vst.msk [vmem:[%s9 + $0x48] sm:$0xff] %vm719, %v2347
  %2377 = vst.msk [vmem:[%s9 + $0x50] sm:$0xff] %vm719, %v2350
  %2378 = vst.msk [vmem:[%s9 + $0x58] sm:$0xff] %vm719, %v2353
  %2379 = vst.msk [vmem:[%s9 + $0x60] sm:$0xff] %vm719, %v2356
  %2380 = vst.msk [vmem:[%s9 + $0x68] sm:$0xff] %vm719, %v2359
  %2381 = vst.msk [vmem:[%s9 + $0x70] sm:$0xff] %vm719, %v2362
  %2382 = vst.msk [vmem:[%s9 + $0x78] sm:$0xff] %vm719, %v2365
  %v2383 = vxor.u32 %v2320, 2147483648
  %v2384 = vxor.u32 %v2323, 2147483648
  %v2385 = vxor.u32 %v2326, 2147483648
  %v2386 = vxor.u32 %v2329, 2147483648
  %v2387 = vxor.u32 %v2332, 2147483648
  %v2388 = vxor.u32 %v2335, 2147483648
  %v2389 = vxor.u32 %v2338, 2147483648
  %v2390 = vxor.u32 %v2341, 2147483648
  %v2391 = vxor.u32 %v2344, 2147483648
  %v2392 = vxor.u32 %v2347, 2147483648
  %v2393 = vxor.u32 %v2350, 2147483648
  %v2394 = vxor.u32 %v2353, 2147483648
  %v2395 = vxor.u32 %v2356, 2147483648
  %v2396 = vxor.u32 %v2359, 2147483648
  %v2397 = vxor.u32 %v2362, 2147483648
  %v2398 = vxor.u32 %v2365, 2147483648
  %v2399 = vmul.f32 %v2383, 1.442695
  %v2400 = vpow.pop %v2399
  %v2401 = vmul.f32 %v2384, 1.442695
  %v2402 = vpow.pop %v2401
  %v2403 = vmul.f32 %v2385, 1.442695
  %v2404 = vpow.pop %v2403
  %v2405 = vmul.f32 %v2386, 1.442695
  %v2406 = vpow.pop %v2405
  %v2407 = vmul.f32 %v2387, 1.442695
  %v2408 = vpow.pop %v2407
  %v2409 = vmul.f32 %v2388, 1.442695
  %v2410 = vpow.pop %v2409
  %v2411 = vmul.f32 %v2389, 1.442695
  %v2412 = vpow.pop %v2411
  %v2413 = vmul.f32 %v2390, 1.442695
  %v2414 = vpow.pop %v2413
  %v2415 = vmul.f32 %v2391, 1.442695
  %v2416 = vpow.pop %v2415
  %v2417 = vmul.f32 %v2392, 1.442695
  %v2418 = vpow.pop %v2417
  %v2419 = vmul.f32 %v2393, 1.442695
  %v2420 = vpow.pop %v2419
  %v2421 = vmul.f32 %v2394, 1.442695
  %v2422 = vpow.pop %v2421
  %v2423 = vmul.f32 %v2395, 1.442695
  %v2424 = vpow.pop %v2423
  %v2425 = vmul.f32 %v2396, 1.442695
  %v2426 = vpow.pop %v2425
  %v2427 = vmul.f32 %v2397, 1.442695
  %v2428 = vpow.pop %v2427
  %v2429 = vmul.f32 %v2398, 1.442695
  %v2430 = vpow.pop %v2429
  %v2431 = vadd.f32 %v2400, 1.0
  %v2432 = vadd.f32 %v2402, 1.0
  %v2433 = vadd.f32 %v2404, 1.0
  %v2434 = vadd.f32 %v2406, 1.0
  %v2435 = vadd.f32 %v2408, 1.0
  %v2436 = vadd.f32 %v2410, 1.0
  %v2437 = vadd.f32 %v2412, 1.0
  %v2438 = vadd.f32 %v2414, 1.0
  %v2439 = vadd.f32 %v2416, 1.0
  %v2440 = vadd.f32 %v2418, 1.0
  %v2441 = vadd.f32 %v2420, 1.0
  %v2442 = vadd.f32 %v2422, 1.0
  %v2443 = vadd.f32 %v2424, 1.0
  %v2444 = vadd.f32 %v2426, 1.0
  %v2445 = vadd.f32 %v2428, 1.0
  %v2446 = vadd.f32 %v2430, 1.0
  %v2447 = vrcp.pop %v2431
  %v2448 = vmul.f32 %v2431, %v2447
  %v2449 = vsub.f32 1.0, %v2448
  %v2450 = vmul.f32 %v2447, %v2449
  %v2451 = vadd.f32 %v2447, %v2450
  %vm2452 = vweird.f32 %v2431
  %vm2453 = vweird.f32 %v2447
  %vm2454 = vmor %vm2452, %vm2453
  %v2455 = vsel %vm2454, %v2447, %v2451
  %v2456 = vand.u32 2147483647, %v2431
  %vm2457 = vcmp.eq.f32.partialorder %v2456, 8.507059e+37
  %v2458 = vand.u32 %v2431, 2147483648
  %v2459 = vor.u32 1.1754944e-38, %v2458
  %v2460 = vsel %vm2457, %v2459, %v2455
  %v2461 = vmul.f32 1.0, %v2460
  %v2462 = vrcp.pop %v2432
  %v2463 = vmul.f32 %v2432, %v2462
  %v2464 = vsub.f32 1.0, %v2463
  %v2465 = vmul.f32 %v2462, %v2464
  %v2466 = vadd.f32 %v2462, %v2465
  %vm2467 = vweird.f32 %v2432
  %vm2468 = vweird.f32 %v2462
  %vm2469 = vmor %vm2467, %vm2468
  %v2470 = vsel %vm2469, %v2462, %v2466
  %v2471 = vand.u32 2147483647, %v2432
  %vm2472 = vcmp.eq.f32.partialorder %v2471, 8.507059e+37
  %v2473 = vand.u32 %v2432, 2147483648
  %v2474 = vor.u32 1.1754944e-38, %v2473
  %v2475 = vsel %vm2472, %v2474, %v2470
  %v2476 = vmul.f32 1.0, %v2475
  %v2477 = vrcp.pop %v2433
  %v2478 = vmul.f32 %v2433, %v2477
  %v2479 = vsub.f32 1.0, %v2478
  %v2480 = vmul.f32 %v2477, %v2479
  %v2481 = vadd.f32 %v2477, %v2480
  %vm2482 = vweird.f32 %v2433
  %vm2483 = vweird.f32 %v2477
  %vm2484 = vmor %vm2482, %vm2483
  %v2485 = vsel %vm2484, %v2477, %v2481
  %v2486 = vand.u32 2147483647, %v2433
  %vm2487 = vcmp.eq.f32.partialorder %v2486, 8.507059e+37
  %v2488 = vand.u32 %v2433, 2147483648
  %v2489 = vor.u32 1.1754944e-38, %v2488
  %v2490 = vsel %vm2487, %v2489, %v2485
  %v2491 = vmul.f32 1.0, %v2490
  %v2492 = vrcp.pop %v2434
  %v2493 = vmul.f32 %v2434, %v2492
  %v2494 = vsub.f32 1.0, %v2493
  %v2495 = vmul.f32 %v2492, %v2494
  %v2496 = vadd.f32 %v2492, %v2495
  %vm2497 = vweird.f32 %v2434
  %vm2498 = vweird.f32 %v2492
  %vm2499 = vmor %vm2497, %vm2498
  %v2500 = vsel %vm2499, %v2492, %v2496
  %v2501 = vand.u32 2147483647, %v2434
  %vm2502 = vcmp.eq.f32.partialorder %v2501, 8.507059e+37
  %v2503 = vand.u32 %v2434, 2147483648
  %v2504 = vor.u32 1.1754944e-38, %v2503
  %v2505 = vsel %vm2502, %v2504, %v2500
  %v2506 = vmul.f32 1.0, %v2505
  %v2507 = vrcp.pop %v2435
  %v2508 = vmul.f32 %v2435, %v2507
  %v2509 = vsub.f32 1.0, %v2508
  %v2510 = vmul.f32 %v2507, %v2509
  %v2511 = vadd.f32 %v2507, %v2510
  %vm2512 = vweird.f32 %v2435
  %vm2513 = vweird.f32 %v2507
  %vm2514 = vmor %vm2512, %vm2513
  %v2515 = vsel %vm2514, %v2507, %v2511
  %v2516 = vand.u32 2147483647, %v2435
  %vm2517 = vcmp.eq.f32.partialorder %v2516, 8.507059e+37
  %v2518 = vand.u32 %v2435, 2147483648
  %v2519 = vor.u32 1.1754944e-38, %v2518
  %v2520 = vsel %vm2517, %v2519, %v2515
  %v2521 = vmul.f32 1.0, %v2520
  %v2522 = vrcp.pop %v2436
  %v2523 = vmul.f32 %v2436, %v2522
  %v2524 = vsub.f32 1.0, %v2523
  %v2525 = vmul.f32 %v2522, %v2524
  %v2526 = vadd.f32 %v2522, %v2525
  %vm2527 = vweird.f32 %v2436
  %vm2528 = vweird.f32 %v2522
  %vm2529 = vmor %vm2527, %vm2528
  %v2530 = vsel %vm2529, %v2522, %v2526
  %v2531 = vand.u32 2147483647, %v2436
  %vm2532 = vcmp.eq.f32.partialorder %v2531, 8.507059e+37
  %v2533 = vand.u32 %v2436, 2147483648
  %v2534 = vor.u32 1.1754944e-38, %v2533
  %v2535 = vsel %vm2532, %v2534, %v2530
  %v2536 = vmul.f32 1.0, %v2535
  %v2537 = vrcp.pop %v2437
  %v2538 = vmul.f32 %v2437, %v2537
  %v2539 = vsub.f32 1.0, %v2538
  %v2540 = vmul.f32 %v2537, %v2539
  %v2541 = vadd.f32 %v2537, %v2540
  %vm2542 = vweird.f32 %v2437
  %vm2543 = vweird.f32 %v2537
  %vm2544 = vmor %vm2542, %vm2543
  %v2545 = vsel %vm2544, %v2537, %v2541
  %v2546 = vand.u32 2147483647, %v2437
  %vm2547 = vcmp.eq.f32.partialorder %v2546, 8.507059e+37
  %v2548 = vand.u32 %v2437, 2147483648
  %v2549 = vor.u32 1.1754944e-38, %v2548
  %v2550 = vsel %vm2547, %v2549, %v2545
  %v2551 = vmul.f32 1.0, %v2550
  %v2552 = vrcp.pop %v2438
  %v2553 = vmul.f32 %v2438, %v2552
  %v2554 = vsub.f32 1.0, %v2553
  %v2555 = vmul.f32 %v2552, %v2554
  %v2556 = vadd.f32 %v2552, %v2555
  %vm2557 = vweird.f32 %v2438
  %vm2558 = vweird.f32 %v2552
  %vm2559 = vmor %vm2557, %vm2558
  %v2560 = vsel %vm2559, %v2552, %v2556
  %v2561 = vand.u32 2147483647, %v2438
  %vm2562 = vcmp.eq.f32.partialorder %v2561, 8.507059e+37
  %v2563 = vand.u32 %v2438, 2147483648
  %v2564 = vor.u32 1.1754944e-38, %v2563
  %v2565 = vsel %vm2562, %v2564, %v2560
  %v2566 = vmul.f32 1.0, %v2565
  %v2567 = vrcp.pop %v2439
  %v2568 = vmul.f32 %v2439, %v2567
  %v2569 = vsub.f32 1.0, %v2568
  %v2570 = vmul.f32 %v2567, %v2569
  %v2571 = vadd.f32 %v2567, %v2570
  %vm2572 = vweird.f32 %v2439
  %vm2573 = vweird.f32 %v2567
  %vm2574 = vmor %vm2572, %vm2573
  %v2575 = vsel %vm2574, %v2567, %v2571
  %v2576 = vand.u32 2147483647, %v2439
  %vm2577 = vcmp.eq.f32.partialorder %v2576, 8.507059e+37
  %v2578 = vand.u32 %v2439, 2147483648
  %v2579 = vor.u32 1.1754944e-38, %v2578
  %v2580 = vsel %vm2577, %v2579, %v2575
  %v2581 = vmul.f32 1.0, %v2580
  %v2582 = vrcp.pop %v2440
  %v2583 = vmul.f32 %v2440, %v2582
  %v2584 = vsub.f32 1.0, %v2583
  %v2585 = vmul.f32 %v2582, %v2584
  %v2586 = vadd.f32 %v2582, %v2585
  %vm2587 = vweird.f32 %v2440
  %vm2588 = vweird.f32 %v2582
  %vm2589 = vmor %vm2587, %vm2588
  %v2590 = vsel %vm2589, %v2582, %v2586
  %v2591 = vand.u32 2147483647, %v2440
  %vm2592 = vcmp.eq.f32.partialorder %v2591, 8.507059e+37
  %v2593 = vand.u32 %v2440, 2147483648
  %v2594 = vor.u32 1.1754944e-38, %v2593
  %v2595 = vsel %vm2592, %v2594, %v2590
  %v2596 = vmul.f32 1.0, %v2595
  %v2597 = vrcp.pop %v2441
  %v2598 = vmul.f32 %v2441, %v2597
  %v2599 = vsub.f32 1.0, %v2598
  %v2600 = vmul.f32 %v2597, %v2599
  %v2601 = vadd.f32 %v2597, %v2600
  %vm2602 = vweird.f32 %v2441
  %vm2603 = vweird.f32 %v2597
  %vm2604 = vmor %vm2602, %vm2603
  %v2605 = vsel %vm2604, %v2597, %v2601
  %v2606 = vand.u32 2147483647, %v2441
  %vm2607 = vcmp.eq.f32.partialorder %v2606, 8.507059e+37
  %v2608 = vand.u32 %v2441, 2147483648
  %v2609 = vor.u32 1.1754944e-38, %v2608
  %v2610 = vsel %vm2607, %v2609, %v2605
  %v2611 = vmul.f32 1.0, %v2610
  %v2612 = vrcp.pop %v2442
  %v2613 = vmul.f32 %v2442, %v2612
  %v2614 = vsub.f32 1.0, %v2613
  %v2615 = vmul.f32 %v2612, %v2614
  %v2616 = vadd.f32 %v2612, %v2615
  %vm2617 = vweird.f32 %v2442
  %vm2618 = vweird.f32 %v2612
  %vm2619 = vmor %vm2617, %vm2618
  %v2620 = vsel %vm2619, %v2612, %v2616
  %v2621 = vand.u32 2147483647, %v2442
  %vm2622 = vcmp.eq.f32.partialorder %v2621, 8.507059e+37
  %v2623 = vand.u32 %v2442, 2147483648
  %v2624 = vor.u32 1.1754944e-38, %v2623
  %v2625 = vsel %vm2622, %v2624, %v2620
  %v2626 = vmul.f32 1.0, %v2625
  %v2627 = vrcp.pop %v2443
  %v2628 = vmul.f32 %v2443, %v2627
  %v2629 = vsub.f32 1.0, %v2628
  %v2630 = vmul.f32 %v2627, %v2629
  %v2631 = vadd.f32 %v2627, %v2630
  %vm2632 = vweird.f32 %v2443
  %vm2633 = vweird.f32 %v2627
  %vm2634 = vmor %vm2632, %vm2633
  %v2635 = vsel %vm2634, %v2627, %v2631
  %v2636 = vand.u32 2147483647, %v2443
  %vm2637 = vcmp.eq.f32.partialorder %v2636, 8.507059e+37
  %v2638 = vand.u32 %v2443, 2147483648
  %v2639 = vor.u32 1.1754944e-38, %v2638
  %v2640 = vsel %vm2637, %v2639, %v2635
  %v2641 = vmul.f32 1.0, %v2640
  %v2642 = vrcp.pop %v2444
  %v2643 = vmul.f32 %v2444, %v2642
  %v2644 = vsub.f32 1.0, %v2643
  %v2645 = vmul.f32 %v2642, %v2644
  %v2646 = vadd.f32 %v2642, %v2645
  %vm2647 = vweird.f32 %v2444
  %vm2648 = vweird.f32 %v2642
  %vm2649 = vmor %vm2647, %vm2648
  %v2650 = vsel %vm2649, %v2642, %v2646
  %v2651 = vand.u32 2147483647, %v2444
  %vm2652 = vcmp.eq.f32.partialorder %v2651, 8.507059e+37
  %v2653 = vand.u32 %v2444, 2147483648
  %v2654 = vor.u32 1.1754944e-38, %v2653
  %v2655 = vsel %vm2652, %v2654, %v2650
  %v2656 = vmul.f32 1.0, %v2655
  %v2657 = vrcp.pop %v2445
  %v2658 = vmul.f32 %v2445, %v2657
  %v2659 = vsub.f32 1.0, %v2658
  %v2660 = vmul.f32 %v2657, %v2659
  %v2661 = vadd.f32 %v2657, %v2660
  %vm2662 = vweird.f32 %v2445
  %vm2663 = vweird.f32 %v2657
  %vm2664 = vmor %vm2662, %vm2663
  %v2665 = vsel %vm2664, %v2657, %v2661
  %v2666 = vand.u32 2147483647, %v2445
  %vm2667 = vcmp.eq.f32.partialorder %v2666, 8.507059e+37
  %v2668 = vand.u32 %v2445, 2147483648
  %v2669 = vor.u32 1.1754944e-38, %v2668
  %v2670 = vsel %vm2667, %v2669, %v2665
  %v2671 = vmul.f32 1.0, %v2670
  %v2672 = vrcp.pop %v2446
  %v2673 = vmul.f32 %v2446, %v2672
  %v2674 = vsub.f32 1.0, %v2673
  %v2675 = vmul.f32 %v2672, %v2674
  %v2676 = vadd.f32 %v2672, %v2675
  %vm2677 = vweird.f32 %v2446
  %vm2678 = vweird.f32 %v2672
  %vm2679 = vmor %vm2677, %vm2678
  %v2680 = vsel %vm2679, %v2672, %v2676
  %v2681 = vand.u32 2147483647, %v2446
  %vm2682 = vcmp.eq.f32.partialorder %v2681, 8.507059e+37
  %v2683 = vand.u32 %v2446, 2147483648
  %v2684 = vor.u32 1.1754944e-38, %v2683
  %v2685 = vsel %vm2682, %v2684, %v2680
  %v2686 = vmul.f32 1.0, %v2685
  %v2687 = vpack.c.bf16 %v2461, %v2461
  %v2688 = vpack.c.bf16 %v2476, %v2476
  %v2689 = vpack.c.bf16 %v2491, %v2491
  %v2690 = vpack.c.bf16 %v2506, %v2506
  %v2691 = vpack.c.bf16 %v2521, %v2521
  %v2692 = vpack.c.bf16 %v2536, %v2536
  %v2693 = vpack.c.bf16 %v2551, %v2551
  %v2694 = vpack.c.bf16 %v2566, %v2566
  %v2695 = vpack.c.bf16 %v2581, %v2581
  %v2696 = vpack.c.bf16 %v2596, %v2596
  %v2697 = vpack.c.bf16 %v2611, %v2611
  %v2698 = vpack.c.bf16 %v2626, %v2626
  %v2699 = vpack.c.bf16 %v2641, %v2641
  %v2700 = vpack.c.bf16 %v2656, %v2656
  %v2701 = vpack.c.bf16 %v2671, %v2671
  %v2702 = vpack.c.bf16 %v2686, %v2686
  %vm2703 = vcmask 519168
  %2704 = vst.msk [vmem:[%s10] sm:$0xf] %vm2703, %v2687
  %2705 = vst.msk [vmem:[%s10 + $0x4] sm:$0xf] %vm2703, %v2688
  %2706 = vst.msk [vmem:[%s10 + $0x8] sm:$0xf] %vm2703, %v2689
  %2707 = vst.msk [vmem:[%s10 + $0xc] sm:$0xf] %vm2703, %v2690
  %2708 = vst.msk [vmem:[%s10 + $0x10] sm:$0xf] %vm2703, %v2691
  %2709 = vst.msk [vmem:[%s10 + $0x14] sm:$0xf] %vm2703, %v2692
  %2710 = vst.msk [vmem:[%s10 + $0x18] sm:$0xf] %vm2703, %v2693
  %2711 = vst.msk [vmem:[%s10 + $0x1c] sm:$0xf] %vm2703, %v2694
  %2712 = vst.msk [vmem:[%s10 + $0x20] sm:$0xf] %vm2703, %v2695
  %2713 = vst.msk [vmem:[%s10 + $0x24] sm:$0xf] %vm2703, %v2696
  %2714 = vst.msk [vmem:[%s10 + $0x28] sm:$0xf] %vm2703, %v2697
  %2715 = vst.msk [vmem:[%s10 + $0x2c] sm:$0xf] %vm2703, %v2698
  %2716 = vst.msk [vmem:[%s10 + $0x30] sm:$0xf] %vm2703, %v2699
  %2717 = vst.msk [vmem:[%s10 + $0x34] sm:$0xf] %vm2703, %v2700
  %2718 = vst.msk [vmem:[%s10 + $0x38] sm:$0xf] %vm2703, %v2701
  %2719 = vst.msk [vmem:[%s10 + $0x3c] sm:$0xf] %vm2703, %v2702
  // Predicated region
  $region38: #{tpu_custom_call.1} parent=0 // pred_check
    _
  $region39: #{tpu_custom_call.1} parent=0 // pred_check_branch
    %2721 = sbr.rel (0) target = $region41
  $region40: #{tpu_custom_call.1} parent=0 // pred_region
    _
  $region41: #{tpu_custom_call.1} parent=0 // pred_fallthru
    _
  // Predicated region
  $region42: #{tpu_custom_call.1} parent=0 // pred_check
    _
  $region43: #{tpu_custom_call.1} parent=0 // pred_check_branch
    %2723 = sbr.rel (0) target = $region45
  $region44: #{tpu_custom_call.1} parent=0 // pred_region
    _
  $region45: #{tpu_custom_call.1} parent=0 // pred_fallthru
    _
  // Predicated region
  $region46: #{tpu_custom_call.1} parent=0 // pred_check
    _
  $region47: #{tpu_custom_call.1} parent=0 // pred_check_branch
    %2725 = sbr.rel (0) target = $region49
  $region48: #{tpu_custom_call.1} parent=0 // pred_region
    _
  $region49: #{tpu_custom_call.1} parent=0 // pred_fallthru
    _
  // Predicated region
  $region50: #{tpu_custom_call.1} parent=0 // pred_check
    _
  $region51: #{tpu_custom_call.1} parent=0 // pred_check_branch
    %2727 = sbr.rel (0) target = $region53
  $region52: #{tpu_custom_call.1} parent=0 // pred_region
    _
  $region53: #{tpu_custom_call.1} parent=0 // pred_fallthru
    _

</llo_original>
